<compile_context>
chip_gen: v7x
topology: tpu7x:2x2x1
jax: 0.10.0
libtpu: 0.0.40
codegen_flags: <defaults>
</compile_context>

<pallas_src>
import numpy as np
import jax
import jax.numpy as jnp
from jax import lax
from jax.experimental import pallas as pl
from jax.experimental.pallas import tpu as pltpu


def _latent_kernel(x_ref, w_ref, b_ref, mu_ref, noise_ref,
                   z_ref, logvar_ref, acc_ref):
    # Grid = (n_tiles, k_tiles); k (contraction) is the innermost / last axis.
    #   x_ref:      (B, tk)   bf16 input slice along the contraction dim
    #   w_ref:      (tk, tn)  bf16 weight tile, (in, out) layout (pre-transposed)
    #   b_ref:      (1, tn)   f32 bias tile
    #   mu_ref:     (B, tn)   f32 x slice along the *output* feature dim (mu tile)
    #   noise_ref:  (B, tn)   f32 standard-normal samples tile
    #   z_ref:      (B, tn)   output
    #   logvar_ref: (B, tn)   output
    #   acc_ref:    (B, tn)   f32 accumulator scratch, resident across the k axis
    k = pl.program_id(1)

    @pl.when(k == 0)
    def _():
        acc_ref[...] = jnp.zeros_like(acc_ref)

    # y += x[:, k-tile] @ W_t[k-tile, n-tile]   (bf16 MXU, f32 accumulation)
    acc_ref[...] += jnp.dot(x_ref[...], w_ref[...],
                            preferred_element_type=jnp.float32)

    @pl.when(k == pl.num_programs(1) - 1)
    def _():
        y = acc_ref[...] + b_ref[...]
        logvar = jnp.where(y >= 0, y, 0.2 * y)          # LeakyReLU(0.2)
        std = jnp.exp(0.5 * logvar)
        z_ref[...] = noise_ref[...] * std + mu_ref[...]  # reparametrize
        logvar_ref[...] = logvar


def _largest_tile(F, cap):
    """Largest divisor of F that is a multiple of 128 and <= cap.  F must be a
    multiple of 128 (guaranteed by wrapper-side padding)."""
    cap = min(cap, F)
    t = (cap // 128) * 128
    while F % t != 0:
        t -= 128
    return t


def _pick_tiles(F_pad):
    """Decoupled (tn, tk).  tk up to 2048 (weight streaming dim), tn up to 1024
    but capped at F/2 when possible so the parallel n axis has >= 2 programs
    (v7x 2-TC sharding); the n split costs only a tiny x-stream re-read at
    small B, so it's effectively free on single-TC v5e/v6e."""
    tk = _largest_tile(F_pad, 2048)
    tn_cap = 1024
    if F_pad >= 256:
        tn_cap = min(tn_cap, F_pad // 2)
    tn = _largest_tile(F_pad, max(tn_cap, 128))
    return tn, tk


def _vmem_need_bytes(B, tn, tk):
    """Double-buffered pipeline footprint (bytes)."""
    w_dbuf = 2 * tk * tn * 2           # bf16 weight tile, dominant term
    x_dbuf = 2 * B * tk * 2            # bf16 x k-stream
    b_dbuf = 2 * tn * 4
    mu_dbuf = 2 * B * tn * 4
    nz_dbuf = 2 * B * tn * 4
    out_dbuf = 2 * 2 * B * tn * 4      # z + logvar
    acc = B * tn * 4
    return w_dbuf + x_dbuf + b_dbuf + mu_dbuf + nz_dbuf + out_dbuf + acc


def stochastic_latent_space_forward(x, weight, bias, noise):
    """x: (B, *shape); weight: (F, F) torch layout (out, in); bias: (F,);
    noise: standard normal with x.shape (torch.randn_like equivalent).
    Returns [z, mu, logvar], each with x.shape (matching the PyTorch module)."""
    B = x.shape[0]
    shape = x.shape[1:]
    F = int(np.prod(shape))

    x_flat_f32 = x.reshape(B, F).astype(jnp.float32)
    noise_flat = noise.reshape(B, F).astype(jnp.float32)
    # One-time parameter transforms (would happen at parameter-load time in
    # real use): (out, in) -> (in, out) layout + bf16 stream dtype.
    w_t = weight.T.astype(jnp.bfloat16)
    b2d = bias.reshape(1, F).astype(jnp.float32)
    # bf16 copy of x for the contraction stream only (mu stays f32).
    x_bf16 = x_flat_f32.astype(jnp.bfloat16)

    # Pad the feature dim to a multiple of 128 so tiling never falls back to a
    # full-extent (F, F) weight block.
    F_pad = ((F + 127) // 128) * 128
    if F_pad != F:
        pad_f = F_pad - F
        x_flat_f32 = jnp.pad(x_flat_f32, ((0, 0), (0, pad_f)))
        x_bf16 = jnp.pad(x_bf16, ((0, 0), (0, pad_f)))
        noise_flat = jnp.pad(noise_flat, ((0, 0), (0, pad_f)))
        w_t = jnp.pad(w_t, ((0, pad_f), (0, pad_f)))
        b2d = jnp.pad(b2d, ((0, 0), (0, pad_f)))

    tn, tk = _pick_tiles(F_pad)
    n_tiles, k_tiles = F_pad // tn, F_pad // tk
    grid = (n_tiles, k_tiles)

    vmem_limit = int(min(max(2 * _vmem_need_bytes(B, tn, tk), 32 << 20), 96 << 20))

    cost = pl.CostEstimate(
        flops=2 * B * F_pad * F_pad,
        transcendentals=B * F_pad,
        bytes_accessed=(F_pad * F_pad * 2          # bf16 weight, read once
                        + n_tiles * B * F_pad * 2  # bf16 x k-stream, re-read per n tile
                        + 2 * B * F_pad * 4        # mu + noise reads
                        + F_pad * 4                # bias
                        + 2 * B * F_pad * 4))      # z + logvar writes

    z_flat, logvar_flat = pl.pallas_call(
        _latent_kernel,
        out_shape=(
            jax.ShapeDtypeStruct((B, F_pad), jnp.float32),
            jax.ShapeDtypeStruct((B, F_pad), jnp.float32),
        ),
        grid_spec=pltpu.PrefetchScalarGridSpec(
            num_scalar_prefetch=0,
            grid=grid,
            in_specs=[
                pl.BlockSpec((B, tk), lambda n, k: (0, k)),    # x, bf16 k-stream
                pl.BlockSpec((tk, tn), lambda n, k: (k, n)),   # weight tile (in, out)
                pl.BlockSpec((1, tn), lambda n, k: (0, n)),    # bias tile
                pl.BlockSpec((B, tn), lambda n, k: (0, n)),    # mu tile (x, f32)
                pl.BlockSpec((B, tn), lambda n, k: (0, n)),    # noise tile
            ],
            out_specs=(
                pl.BlockSpec((B, tn), lambda n, k: (0, n)),
                pl.BlockSpec((B, tn), lambda n, k: (0, n)),
            ),
            scratch_shapes=[pltpu.VMEM((B, tn), jnp.float32)],
        ),
        compiler_params=pltpu.CompilerParams(
            dimension_semantics=("parallel", "arbitrary"),
            vmem_limit_bytes=vmem_limit),
        cost_estimate=cost,
    )(x_bf16, w_t, b2d, x_flat_f32, noise_flat)

    if F_pad != F:
        z_flat = z_flat[:, :F]
        logvar_flat = logvar_flat[:, :F]

    z = z_flat.reshape(B, *shape)     # decode(): reshape back to output_shape
    mu = x                            # encode() returns x unchanged as mu
    logvar = logvar_flat.reshape(x.shape)
    return [z, mu, logvar]


if __name__ == "__main__":
    # Small shapes consistent with the module: input_shape == output_shape == (C, H, W)
    B, C, H, W = 2, 4, 16, 16
    Fdim = C * H * W  # 1024

    key = jax.random.PRNGKey(0)
    kx, kw, kb, kn = jax.random.split(key, 4)

    x = jax.random.normal(kx, (B, C, H, W), dtype=jnp.float32)
    # Deterministic synthetic nn.Linear(flat_in, flat_out) parameters
    bound = 1.0 / np.sqrt(Fdim)
    weight = jax.random.uniform(kw, (Fdim, Fdim), minval=-bound, maxval=bound,
                                dtype=jnp.float32)
    bias = jax.random.uniform(kb, (Fdim,), minval=-bound, maxval=bound,
                              dtype=jnp.float32)
    # torch.randn_like(mu) equivalent, generated deterministically in JAX
    noise = jax.random.normal(kn, (B, C, H, W), dtype=jnp.float32)

    z, mu, logvar = stochastic_latent_space_forward(x, weight, bias, noise)
    jax.block_until_ready((z, mu, logvar))

    # Pure-JAX reference mirroring the kernel's bf16-weight / bf16-activation MXU math
    x_flat = x.reshape(B, Fdim)
    y_ref = jnp.dot(x_flat.astype(jnp.bfloat16),
                    weight.T.astype(jnp.bfloat16),
                    preferred_element_type=jnp.float32) + bias
    logvar_ref = jnp.where(y_ref >= 0, y_ref, 0.2 * y_ref)
    z_ref = noise.reshape(B, Fdim) * jnp.exp(0.5 * logvar_ref) + x_flat

    assert jnp.allclose(logvar, logvar_ref.reshape(x.shape), atol=2e-3, rtol=2e-3)
    assert jnp.allclose(z, z_ref.reshape(x.shape), atol=2e-3, rtol=2e-3)
    assert jnp.array_equal(mu, x)

    print("KERNEL_OK")
</pallas_src>

<mosaic_0001>
module attributes {stable_mosaic.version = 11 : i64} {
  func.func @_latent_kernel(%arg0: i32, %arg1: i32, %arg2: memref<2x1024xbf16, #tpu.memory_space<vmem>>, %arg3: memref<1024x512xbf16, #tpu.memory_space<vmem>>, %arg4: memref<1x512xf32, #tpu.memory_space<vmem>>, %arg5: memref<2x512xf32, #tpu.memory_space<vmem>>, %arg6: memref<2x512xf32, #tpu.memory_space<vmem>>, %arg7: memref<2x512xf32, #tpu.memory_space<vmem>>, %arg8: memref<2x512xf32, #tpu.memory_space<vmem>>, %arg9: memref<2x512xf32, #tpu.memory_space<vmem>>) attributes {dimension_semantics = [#tpu.dimension_semantics<parallel>, #tpu.dimension_semantics<arbitrary>], iteration_bounds = array<i64: 2, 1>, scalar_prefetch = 0 : i64, scratch_operands = 1 : i64, tpu.core_type = #tpu.core_type<tc>, window_params = [{transform_indices = @transform_0, window_bounds = array<i64: 2, 1024>}, {transform_indices = @transform_1, window_bounds = array<i64: 1024, 512>}, {transform_indices = @transform_2, window_bounds = array<i64: 1, 512>}, {transform_indices = @transform_3, window_bounds = array<i64: 2, 512>}, {transform_indices = @transform_4, window_bounds = array<i64: 2, 512>}, {transform_indices = @transform_5, window_bounds = array<i64: 2, 512>}, {transform_indices = @transform_6, window_bounds = array<i64: 2, 512>}]} {
    %c0_i32 = arith.constant 0 : i32
    %0 = arith.cmpi eq, %arg1, %c0_i32 : i32
    %1 = arith.extui %0 : i1 to i32
    %c0_i32_0 = arith.constant 0 : i32
    %2 = arith.cmpi ne, %1, %c0_i32_0 : i32
    scf.if %2 {
      %cst_10 = arith.constant 0.000000e+00 : f32
      %12 = vector.broadcast %cst_10 : f32 to vector<2x512xf32>
      %c0_11 = arith.constant 0 : index
      %c0_12 = arith.constant 0 : index
      %13 = vector.load %arg9[%c0_11, %c0_12] : memref<2x512xf32, #tpu.memory_space<vmem>>, vector<2x512xf32>
      tpu.vector_store %arg9[%c0_11, %c0_12], %12 {strides = array<i32>} : memref<2x512xf32, #tpu.memory_space<vmem>>, vector<2x512xf32>,
    } else {
    }
    %c0 = arith.constant 0 : index
    %c0_1 = arith.constant 0 : index
    %3 = vector.load %arg9[%c0, %c0_1] : memref<2x512xf32, #tpu.memory_space<vmem>>, vector<2x512xf32>
    %c0_2 = arith.constant 0 : index
    %c0_3 = arith.constant 0 : index
    %4 = vector.load %arg2[%c0_2, %c0_3] : memref<2x1024xbf16, #tpu.memory_space<vmem>>, vector<2x1024xbf16>
    %c0_4 = arith.constant 0 : index
    %c0_5 = arith.constant 0 : index
    %5 = vector.load %arg3[%c0_4, %c0_5] : memref<1024x512xbf16, #tpu.memory_space<vmem>>, vector<1024x512xbf16>
    %cst = arith.constant dense<0.000000e+00> : vector<2x512xf32>
    %6 = tpu.matmul %4, %5, %cst {dimension_numbers = #tpu.dot_dimension_numbers<[1], [0], [0], [1], [0, 0, 1, 1], [], []>} : vector<2x1024xbf16>, vector<1024x512xbf16>, vector<2x512xf32> -> vector<2x512xf32>
    %7 = arith.addf %3, %6 : vector<2x512xf32>
    %c0_6 = arith.constant 0 : index
    %c0_7 = arith.constant 0 : index
    %8 = vector.load %arg9[%c0_6, %c0_7] : memref<2x512xf32, #tpu.memory_space<vmem>>, vector<2x512xf32>
    tpu.vector_store %arg9[%c0_6, %c0_7], %7 {strides = array<i32>} : memref<2x512xf32, #tpu.memory_space<vmem>>, vector<2x512xf32>,
    %c0_i32_8 = arith.constant 0 : i32
    %9 = arith.cmpi eq, %arg1, %c0_i32_8 : i32
    %10 = arith.extui %9 : i1 to i32
    %c0_i32_9 = arith.constant 0 : i32
    %11 = arith.cmpi ne, %10, %c0_i32_9 : i32
    scf.if %11 {
      %c0_10 = arith.constant 0 : index
      %c0_11 = arith.constant 0 : index
      %12 = vector.load %arg9[%c0_10, %c0_11] : memref<2x512xf32, #tpu.memory_space<vmem>>, vector<2x512xf32>
      %c0_12 = arith.constant 0 : index
      %c0_13 = arith.constant 0 : index
      %13 = vector.load %arg4[%c0_12, %c0_13] : memref<1x512xf32, #tpu.memory_space<vmem>>, vector<1x512xf32>
      %14 = vector.broadcast %13 : vector<1x512xf32> to vector<2x512xf32>
      %15 = arith.addf %12, %14 : vector<2x512xf32>
      %cst_14 = arith.constant 0.000000e+00 : f32
      %16 = vector.broadcast %cst_14 : f32 to vector<2x512xf32>
      %17 = arith.cmpf oge, %15, %16 : vector<2x512xf32>
      %cst_15 = arith.constant 2.000000e-01 : f32
      %18 = vector.broadcast %cst_15 : f32 to vector<2x512xf32>
      %19 = arith.mulf %18, %15 : vector<2x512xf32>
      %20 = arith.select %17, %15, %19 : vector<2x512xi1>, vector<2x512xf32>
      %cst_16 = arith.constant 5.000000e-01 : f32
      %21 = vector.broadcast %cst_16 : f32 to vector<2x512xf32>
      %22 = arith.mulf %21, %20 : vector<2x512xf32>
      %23 = math.exp %22 : vector<2x512xf32>
      %c0_17 = arith.constant 0 : index
      %c0_18 = arith.constant 0 : index
      %24 = vector.load %arg6[%c0_17, %c0_18] : memref<2x512xf32, #tpu.memory_space<vmem>>, vector<2x512xf32>
      %25 = arith.mulf %24, %23 : vector<2x512xf32>
      %c0_19 = arith.constant 0 : index
      %c0_20 = arith.constant 0 : index
      %26 = vector.load %arg5[%c0_19, %c0_20] : memref<2x512xf32, #tpu.memory_space<vmem>>, vector<2x512xf32>
      %27 = arith.addf %25, %26 : vector<2x512xf32>
      %c0_21 = arith.constant 0 : index
      %c0_22 = arith.constant 0 : index
      %28 = vector.load %arg7[%c0_21, %c0_22] : memref<2x512xf32, #tpu.memory_space<vmem>>, vector<2x512xf32>
      tpu.vector_store %arg7[%c0_21, %c0_22], %27 {strides = array<i32>} : memref<2x512xf32, #tpu.memory_space<vmem>>, vector<2x512xf32>,
      %c0_23 = arith.constant 0 : index
      %c0_24 = arith.constant 0 : index
      %29 = vector.load %arg8[%c0_23, %c0_24] : memref<2x512xf32, #tpu.memory_space<vmem>>, vector<2x512xf32>
      tpu.vector_store %arg8[%c0_23, %c0_24], %20 {strides = array<i32>} : memref<2x512xf32, #tpu.memory_space<vmem>>, vector<2x512xf32>,
    } else {
    }
    return
  }
  func.func @transform_0(%arg0: i32, %arg1: i32) -> (i32, i32) {
    %c0_i32 = arith.constant 0 : i32
    %c0_i32_0 = arith.constant 0 : i32
    return %c0_i32, %arg1 : i32, i32
  }
  func.func @transform_1(%arg0: i32, %arg1: i32) -> (i32, i32) {
    %c0_i32 = arith.constant 0 : i32
    return %arg1, %arg0 : i32, i32
  }
  func.func @transform_2(%arg0: i32, %arg1: i32) -> (i32, i32) {
    %c0_i32 = arith.constant 0 : i32
    %c0_i32_0 = arith.constant 0 : i32
    return %c0_i32, %arg0 : i32, i32
  }
  func.func @transform_3(%arg0: i32, %arg1: i32) -> (i32, i32) {
    %c0_i32 = arith.constant 0 : i32
    %c0_i32_0 = arith.constant 0 : i32
    return %c0_i32, %arg0 : i32, i32
  }
  func.func @transform_4(%arg0: i32, %arg1: i32) -> (i32, i32) {
    %c0_i32 = arith.constant 0 : i32
    %c0_i32_0 = arith.constant 0 : i32
    return %c0_i32, %arg0 : i32, i32
  }
  func.func @transform_5(%arg0: i32, %arg1: i32) -> (i32, i32) {
    %c0_i32 = arith.constant 0 : i32
    %c0_i32_0 = arith.constant 0 : i32
    return %c0_i32, %arg0 : i32, i32
  }
  func.func @transform_6(%arg0: i32, %arg1: i32) -> (i32, i32) {
    %c0_i32 = arith.constant 0 : i32
    %c0_i32_0 = arith.constant 0 : i32
    return %c0_i32, %arg0 : i32, i32
  }
}

</mosaic_0001>

<llo_original>
// kernel: tpu_custom_call.1
$region0: #{tpu_custom_call.1}
  #allocation0 [shape = 'u32[]', space=smem, size = 0x4, offset = 0x4, fixed_abs, tag = 'smem constant byte address 0x4 - core index']
  #allocation1 [shape = 'u32[144,128]{1,0:T(1,128)}', space=vmem, size = 0x12000, scoped, tag = 'internal scratch']
  #allocation2 [shape = 'f32[2,512]{1,0:T(2,128)}', space=vmem, size = 0x1000, scoped, tag = 'scratch operand']
  %s0 = inlined_call_operand.hbm [shape: bf16[2,1024], index: 0, kind: input, shape index: {}]
  %s1 = inlined_call_operand.hbm [shape: bf16[1024,1024], index: 1, kind: input, shape index: {}]
  %s2 = inlined_call_operand.hbm [shape: f32[1,1024], index: 2, kind: input, shape index: {}]
  %s3 = inlined_call_operand.hbm [shape: f32[2,1024], index: 3, kind: input, shape index: {}]
  %s4 = inlined_call_operand.hbm [shape: f32[2,1024], index: 4, kind: input, shape index: {}]
  %s5 = inlined_call_operand.hbm [shape: f32[2,1024], index: 5, kind: output, shape index: {0}]
  %s6 = inlined_call_operand.hbm [shape: f32[2,1024], index: 6, kind: output, shape index: {1}]
  %7 = xla_tuple %s5, %s6
  %s8 = sld [smem:[#allocation0]]
  $region89: #{tpu_custom_call.1} parent=0
    _
  %s10 = ssub.s32 1, %s8
  %s11 = scalar_select 0, %s10, %s8
  $region1: #{tpu_custom_call.1} parent=0
    #allocation3 [shape = 'u8[4096]{0}', space=vmem, size = 0x1000, scoped, tag = 'input window, operand 0, single buffered']
    #allocation4 [shape = 's32[2]{0}', space=sflag, size = 0x8, scoped, tag = 'scoped memory for tpu_custom_call.1']
    #allocation5 [shape = 's32[2]{0}', space=sflag, size = 0x8, scoped, tag = 'scoped memory for tpu_custom_call.1']
    #allocation6 [shape = 'u8[2097152]{0}', space=vmem, size = 0x200000, scoped, tag = 'input window, operand 1']
    #allocation7 [shape = 's32[2]{0}', space=sflag, size = 0x8, scoped, tag = 'scoped memory for tpu_custom_call.1']
    #allocation8 [shape = 'u8[4096]{0}', space=vmem, size = 0x1000, scoped, tag = 'input window, operand 2']
    #allocation9 [shape = 'u8[8192]{0}', space=vmem, size = 0x2000, scoped, tag = 'input window, operand 3']
    #allocation10 [shape = 's32[2]{0}', space=sflag, size = 0x8, scoped, tag = 'scoped memory for tpu_custom_call.1']
    #allocation11 [shape = 'u8[8192]{0}', space=vmem, size = 0x2000, scoped, tag = 'input window, operand 4']
    #allocation12 [shape = 'u8[8192]{0}', space=vmem, size = 0x2000, scoped, tag = 'output window, operand 0']
    #allocation13 [shape = 'u8[8192]{0}', space=vmem, size = 0x2000, scoped, tag = 'output window, operand 1']
    #allocation14 [shape = 's32[2]{0}', space=sflag, size = 0x8, scoped, tag = 'scoped memory for tpu_custom_call.1']
    %12 = vsyncpa [#allocation4], 0
    %13 = vsyncpa [#allocation7], 0
    %s14 = scalar_lea.sflag [#allocation7], 1
    %15 = vsyncpa %s14, 0
    %16 = vsyncpa [#allocation10], 0
    %s17 = scalar_lea.sflag [#allocation10], 1
    %18 = vsyncpa %s17, 0
    %19 = vsyncpa [#allocation5], 0
    %s20 = scalar_lea.sflag [#allocation5], 1
    %21 = vsyncpa %s20, 0
    %22 = vsyncpa [#allocation14], 0
    %s23 = scalar_lea.sflag [#allocation14], 1
    %24 = vsyncpa %s23, 0
    loop: start=0, step=1, limit=4
    $region2: #{tpu_custom_call.1} parent=1 // loop_pre_header
      _
    $region3: #{tpu_custom_call.1} parent=1 // loop_header
      %s26 = sphi 0, %s30
      %p27 = scmp.ge.s32.totalorder %s26, 4
      %s33 = sphi 0, %s45
      %s34 = sphi 0, %s41
      %s35 = sphi 0, %s33
      %s36 = sphi 0, %s34
      %s37 = sphi 0, %s35
      %s38 = sphi 0, %s36
      %s48 = sphi 0, %s50
      %s51 = sphi 0, %s48
      %s52 = sphi 0, %s51
      %s68 = sphi 0, %s52
      %s76 = sphi 0, %s78
      %s79 = sphi 0, %s76
      %s80 = sphi 0, %s79
      %s96 = sphi 0, %s80
      %s102 = sphi 0, %s104
      %s105 = sphi 0, %s102
      %s106 = sphi 0, %s105
      %s122 = sphi 0, %s106
      %s128 = sphi 0, %s130
      %s131 = sphi 0, %s128
      %s132 = sphi 0, %s131
      %s148 = sphi 0, %s132
      %s154 = sphi 0, %s156
      %s157 = sphi 0, %s154
      %s158 = sphi 0, %s157
      %s174 = sphi 0, %s158
      %s180 = sphi 0, %s182
      %s183 = sphi 0, %s180
      %s184 = sphi 0, %s183
      %s200 = sphi 0, %s184
      %s206 = sphi 0, %s208
      %s209 = sphi 0, %s206
      %s210 = sphi 0, %s209
      %s226 = sphi 0, %s210
    $region4: #{tpu_custom_call.1} parent=1 // loop_header_branch
      %29 = sbr.rel (%p27) target = $region8
    $region5: #{tpu_custom_call.1} parent=1 // loop_body
      %s31 = ssub.s32 %s26, 1
      %s32 = ssub.s32 %s26, 2
      %s39 = sadd.s32 1, %s34
      %p40 = scmp.ge.s32.totalorder %s39, 1
      %s41 = scalar_select %p40, 0, %s39
      %s42 = sadd.s32 1, %s33
      %s43 = scalar_select %p40, %s42, %s33
      %p44 = scmp.ge.s32.totalorder %s43, 2
      %s45 = scalar_select %p44, 0, %s43
      %s46 = ssub.s32 %s34, %s41
      %p47 = scmp.eq.s32.totalorder %s46, 0
      %s49 = sadd.s32 %s48, 1
      %s50 = scalar_select %p47, %s48, %s49
      %p53 = pneg %p47
      %p54 = scmp.eq.s32.totalorder %s26, 1
      %p55 = por %p53, %p54
      %p56 = scmp.ne.s32.totalorder %s48, %s51
      %p57 = scmp.eq.s32.totalorder %s26, 0
      %p58 = por %p56, %p57
      %p59 = scmp.ne.s32.totalorder %s48, %s51
      %p60 = scmp.eq.s32.totalorder %s31, 1
      %p61 = por %p59, %p60
      %p62 = scmp.ne.s32.totalorder %s51, %s52
      %p63 = scmp.eq.s32.totalorder %s31, 0
      %p64 = por %p62, %p63
      %p65 = scmp.ne.s32.totalorder %s51, %s52
      %p66 = scmp.eq.s32.totalorder %s32, 1
      %p67 = por %p65, %p66
      %p69 = scmp.ne.s32.totalorder %s52, %s68
      %p70 = scmp.eq.s32.totalorder %s32, 0
      %p71 = por %p69, %p70
      %s72 = ssub.s32 %s34, %s41
      %s73 = ssub.s32 %s33, %s45
      %s74 = sor.u32 %s72, %s73
      %p75 = scmp.eq.s32.totalorder %s74, 0
      %s77 = sadd.s32 %s76, 1
      %s78 = scalar_select %p75, %s76, %s77
      %p81 = pneg %p75
      %p82 = scmp.eq.s32.totalorder %s26, 1
      %p83 = por %p81, %p82
      %p84 = scmp.ne.s32.totalorder %s76, %s79
      %p85 = scmp.eq.s32.totalorder %s26, 0
      %p86 = por %p84, %p85
      %p87 = scmp.ne.s32.totalorder %s76, %s79
      %p88 = scmp.eq.s32.totalorder %s31, 1
      %p89 = por %p87, %p88
      %p90 = scmp.ne.s32.totalorder %s79, %s80
      %p91 = scmp.eq.s32.totalorder %s31, 0
      %p92 = por %p90, %p91
      %p93 = scmp.ne.s32.totalorder %s79, %s80
      %p94 = scmp.eq.s32.totalorder %s32, 1
      %p95 = por %p93, %p94
      %p97 = scmp.ne.s32.totalorder %s80, %s96
      %p98 = scmp.eq.s32.totalorder %s32, 0
      %p99 = por %p97, %p98
      %s100 = ssub.s32 %s33, %s45
      %p101 = scmp.eq.s32.totalorder %s100, 0
      %s103 = sadd.s32 %s102, 1
      %s104 = scalar_select %p101, %s102, %s103
      %p107 = pneg %p101
      %p108 = scmp.eq.s32.totalorder %s26, 1
      %p109 = por %p107, %p108
      %p110 = scmp.ne.s32.totalorder %s102, %s105
      %p111 = scmp.eq.s32.totalorder %s26, 0
      %p112 = por %p110, %p111
      %p113 = scmp.ne.s32.totalorder %s102, %s105
      %p114 = scmp.eq.s32.totalorder %s31, 1
      %p115 = por %p113, %p114
      %p116 = scmp.ne.s32.totalorder %s105, %s106
      %p117 = scmp.eq.s32.totalorder %s31, 0
      %p118 = por %p116, %p117
      %p119 = scmp.ne.s32.totalorder %s105, %s106
      %p120 = scmp.eq.s32.totalorder %s32, 1
      %p121 = por %p119, %p120
      %p123 = scmp.ne.s32.totalorder %s106, %s122
      %p124 = scmp.eq.s32.totalorder %s32, 0
      %p125 = por %p123, %p124
      %s126 = ssub.s32 %s33, %s45
      %p127 = scmp.eq.s32.totalorder %s126, 0
      %s129 = sadd.s32 %s128, 1
      %s130 = scalar_select %p127, %s128, %s129
      %p133 = pneg %p127
      %p134 = scmp.eq.s32.totalorder %s26, 1
      %p135 = por %p133, %p134
      %p136 = scmp.ne.s32.totalorder %s128, %s131
      %p137 = scmp.eq.s32.totalorder %s26, 0
      %p138 = por %p136, %p137
      %p139 = scmp.ne.s32.totalorder %s128, %s131
      %p140 = scmp.eq.s32.totalorder %s31, 1
      %p141 = por %p139, %p140
      %p142 = scmp.ne.s32.totalorder %s131, %s132
      %p143 = scmp.eq.s32.totalorder %s31, 0
      %p144 = por %p142, %p143
      %p145 = scmp.ne.s32.totalorder %s131, %s132
      %p146 = scmp.eq.s32.totalorder %s32, 1
      %p147 = por %p145, %p146
      %p149 = scmp.ne.s32.totalorder %s132, %s148
      %p150 = scmp.eq.s32.totalorder %s32, 0
      %p151 = por %p149, %p150
      %s152 = ssub.s32 %s33, %s45
      %p153 = scmp.eq.s32.totalorder %s152, 0
      %s155 = sadd.s32 %s154, 1
      %s156 = scalar_select %p153, %s154, %s155
      %p159 = pneg %p153
      %p160 = scmp.eq.s32.totalorder %s26, 1
      %p161 = por %p159, %p160
      %p162 = scmp.ne.s32.totalorder %s154, %s157
      %p163 = scmp.eq.s32.totalorder %s26, 0
      %p164 = por %p162, %p163
      %p165 = scmp.ne.s32.totalorder %s154, %s157
      %p166 = scmp.eq.s32.totalorder %s31, 1
      %p167 = por %p165, %p166
      %p168 = scmp.ne.s32.totalorder %s157, %s158
      %p169 = scmp.eq.s32.totalorder %s31, 0
      %p170 = por %p168, %p169
      %p171 = scmp.ne.s32.totalorder %s157, %s158
      %p172 = scmp.eq.s32.totalorder %s32, 1
      %p173 = por %p171, %p172
      %p175 = scmp.ne.s32.totalorder %s158, %s174
      %p176 = scmp.eq.s32.totalorder %s32, 0
      %p177 = por %p175, %p176
      %s178 = ssub.s32 %s33, %s45
      %p179 = scmp.eq.s32.totalorder %s178, 0
      %s181 = sadd.s32 %s180, 1
      %s182 = scalar_select %p179, %s180, %s181
      %p185 = pneg %p179
      %p186 = scmp.eq.s32.totalorder %s26, 1
      %p187 = por %p185, %p186
      %p188 = scmp.ne.s32.totalorder %s180, %s183
      %p189 = scmp.eq.s32.totalorder %s26, 0
      %p190 = por %p188, %p189
      %p191 = scmp.ne.s32.totalorder %s180, %s183
      %p192 = scmp.eq.s32.totalorder %s31, 1
      %p193 = por %p191, %p192
      %p194 = scmp.ne.s32.totalorder %s183, %s184
      %p195 = scmp.eq.s32.totalorder %s31, 0
      %p196 = por %p194, %p195
      %p197 = scmp.ne.s32.totalorder %s183, %s184
      %p198 = scmp.eq.s32.totalorder %s32, 1
      %p199 = por %p197, %p198
      %p201 = scmp.ne.s32.totalorder %s184, %s200
      %p202 = scmp.eq.s32.totalorder %s32, 0
      %p203 = por %p201, %p202
      %s204 = ssub.s32 %s33, %s45
      %p205 = scmp.eq.s32.totalorder %s204, 0
      %s207 = sadd.s32 %s206, 1
      %s208 = scalar_select %p205, %s206, %s207
      %p211 = pneg %p205
      %p212 = scmp.eq.s32.totalorder %s26, 1
      %p213 = por %p211, %p212
      %p214 = scmp.ne.s32.totalorder %s206, %s209
      %p215 = scmp.eq.s32.totalorder %s26, 0
      %p216 = por %p214, %p215
      %p217 = scmp.ne.s32.totalorder %s206, %s209
      %p218 = scmp.eq.s32.totalorder %s31, 1
      %p219 = por %p217, %p218
      %p220 = scmp.ne.s32.totalorder %s209, %s210
      %p221 = scmp.eq.s32.totalorder %s31, 0
      %p222 = por %p220, %p221
      %p223 = scmp.ne.s32.totalorder %s209, %s210
      %p224 = scmp.eq.s32.totalorder %s32, 1
      %p225 = por %p223, %p224
      %p227 = scmp.ne.s32.totalorder %s210, %s226
      %p228 = scmp.eq.s32.totalorder %s32, 0
      %p229 = por %p227, %p228
      %p230 = scmp.le.s32.totalorder 1, %s26
      %p231 = scmp.lt.s32.totalorder %s26, 3
      %p232 = pnand %p230, %p231
      %p233 = pneg %p232
      // Predicated region
      $region9: #{tpu_custom_call.1} parent=5 // pred_check
        _
      $region10: #{tpu_custom_call.1} parent=5 // pred_check_branch
        %235 = sbr.rel (%p232) target = $region12
      $region11: #{tpu_custom_call.1} parent=5 // pred_region
        %s236 = ssub.s32 %s26, 1
        // Predicated region
        $region13: #{tpu_custom_call.1} parent=11 // pred_check
          %p237 = pneg %p64
        $region14: #{tpu_custom_call.1} parent=11 // pred_check_branch
          %239 = sbr.rel (%p237) target = $region16
        $region15: #{tpu_custom_call.1} parent=11 // pred_region
          %s240 = smul.u32 8, %s36
          %s242 = ssub.s32 128, 128
          %243 = vsyncadd [#allocation4], %s242
          %s244 = smul.addr %s240, 16
          %s245 = scalar_lea.hbm %s0, %s244
          %s247 = sshll.u32 [#allocation3], 4
          %s248 = int_to_ptr.vmem [resolvable:$true] %s247
          %250 = dma.hbm_to_vmem [thread:$0]  %s245, 128, %s248, [#allocation4]
        $region16: #{tpu_custom_call.1} parent=11 // pred_fallthru
          _
      $region12: #{tpu_custom_call.1} parent=5 // pred_fallthru
        _
      %p251 = scmp.lt.s32.totalorder %s26, 2
      // Predicated region
      $region17: #{tpu_custom_call.1} parent=5 // pred_check
        %p252 = pneg %p251
      $region18: #{tpu_custom_call.1} parent=5 // pred_check_branch
        %254 = sbr.rel (%p252) target = $region20
      $region19: #{tpu_custom_call.1} parent=5 // pred_region
        // Predicated region
        $region21: #{tpu_custom_call.1} parent=19 // pred_check
          %p255 = pneg %p86
        $region22: #{tpu_custom_call.1} parent=19 // pred_check_branch
          %257 = sbr.rel (%p255) target = $region24
        $region23: #{tpu_custom_call.1} parent=19 // pred_region
          %s258 = sand.u32 %s26, 1
          %s259 = scalar_lea.sflag [#allocation7], %s258
          %s260 = sand.u32 %s76, 1
          %s261 = smul.addr %s260, 2048
          %s262 = scalar_lea.vmem [#allocation6], %s261
          %s263 = smul.u32 128, %s34
          %s264 = smul.u32 4, %s33
          %s266 = ssub.s32 32768, 32768
          %267 = vsyncadd %s259, %s266
          %s268 = smul.addr %s263, 8
          %s269 = sadd.s32 %s264, %s268
          %s270 = smul.addr %s269, 64
          %s271 = scalar_lea.hbm %s1, %s270
          %s272 = sshll.u32 %s262, 4
          %s273 = int_to_ptr.vmem [resolvable:$true] %s272
          %278 = dma.hbm_to_vmem [thread:$0]  %s271, 32768, %s273, %s259, 512, 256, 16
        $region24: #{tpu_custom_call.1} parent=19 // pred_fallthru
          _
        // Predicated region
        $region25: #{tpu_custom_call.1} parent=19 // pred_check
          %p279 = pneg %p112
        $region26: #{tpu_custom_call.1} parent=19 // pred_check_branch
          %281 = sbr.rel (%p279) target = $region28
        $region27: #{tpu_custom_call.1} parent=19 // pred_region
          %s282 = sand.u32 %s26, 1
          %s283 = scalar_lea.sflag [#allocation7], %s282
          %s284 = sand.u32 %s102, 1
          %s285 = smul.addr %s284, 4
          %s286 = scalar_lea.vmem [#allocation8], %s285
          %s287 = smul.u32 4, %s33
          %s289 = ssub.s32 64, 64
          %290 = vsyncadd %s283, %s289
          %s291 = smul.addr %s287, 16
          %s292 = scalar_lea.hbm %s2, %s291
          %s294 = sshll.u32 %s286, 4
          %s295 = int_to_ptr.vmem [resolvable:$true] %s294
          %297 = dma.hbm_to_vmem [thread:$0]  %s292, 64, %s295, %s283
        $region28: #{tpu_custom_call.1} parent=19 // pred_fallthru
          _
        // Predicated region
        $region29: #{tpu_custom_call.1} parent=19 // pred_check
          %p298 = pneg %p138
        $region30: #{tpu_custom_call.1} parent=19 // pred_check_branch
          %300 = sbr.rel (%p298) target = $region32
        $region31: #{tpu_custom_call.1} parent=19 // pred_region
          %s301 = sand.u32 %s26, 1
          %s302 = scalar_lea.sflag [#allocation10], %s301
          %s303 = sand.u32 %s128, 1
          %s304 = smul.addr %s303, 8
          %s305 = scalar_lea.vmem [#allocation9], %s304
          %s306 = smul.u32 4, %s33
          %s308 = ssub.s32 128, 128
          %309 = vsyncadd %s302, %s308
          %s310 = smul.addr %s306, 32
          %s311 = scalar_lea.hbm %s3, %s310
          %s313 = sshll.u32 %s305, 4
          %s314 = int_to_ptr.vmem [resolvable:$true] %s313
          %316 = dma.hbm_to_vmem [thread:$0]  %s311, 128, %s314, %s302
        $region32: #{tpu_custom_call.1} parent=19 // pred_fallthru
          _
        // Predicated region
        $region33: #{tpu_custom_call.1} parent=19 // pred_check
          %p317 = pneg %p164
        $region34: #{tpu_custom_call.1} parent=19 // pred_check_branch
          %319 = sbr.rel (%p317) target = $region36
        $region35: #{tpu_custom_call.1} parent=19 // pred_region
          %s320 = sand.u32 %s26, 1
          %s321 = scalar_lea.sflag [#allocation10], %s320
          %s322 = sand.u32 %s154, 1
          %s323 = smul.addr %s322, 8
          %s324 = scalar_lea.vmem [#allocation11], %s323
          %s325 = smul.u32 4, %s33
          %s327 = ssub.s32 128, 128
          %328 = vsyncadd %s321, %s327
          %s329 = smul.addr %s325, 32
          %s330 = scalar_lea.hbm %s4, %s329
          %s332 = sshll.u32 %s324, 4
          %s333 = int_to_ptr.vmem [resolvable:$true] %s332
          %335 = dma.hbm_to_vmem [thread:$0]  %s330, 128, %s333, %s321
        $region36: #{tpu_custom_call.1} parent=19 // pred_fallthru
          _
      $region20: #{tpu_custom_call.1} parent=5 // pred_fallthru
        _
      %p336 = scmp.le.s32.totalorder 1, %s26
      %p337 = scmp.lt.s32.totalorder %s26, 3
      %p338 = pnand %p336, %p337
      %p339 = pneg %p338
      // Predicated region
      $region37: #{tpu_custom_call.1} parent=5 // pred_check
        _
      $region38: #{tpu_custom_call.1} parent=5 // pred_check_branch
        %341 = sbr.rel (%p338) target = $region40
      $region39: #{tpu_custom_call.1} parent=5 // pred_region
        %s342 = ssub.s32 %s26, 1
        // Predicated region
        $region41: #{tpu_custom_call.1} parent=39 // pred_check
          %p343 = pneg %p64
        $region42: #{tpu_custom_call.1} parent=39 // pred_check_branch
          %345 = sbr.rel (%p343) target = $region44
        $region43: #{tpu_custom_call.1} parent=39 // pred_region
          %346 = dma.done [#allocation4], 128
        $region44: #{tpu_custom_call.1} parent=39 // pred_fallthru
          _
        %s347 = sand.u32 %s31, 1
        %s348 = scalar_lea.sflag [#allocation7], %s347
        %s349 = sand.u32 %s79, 1
        %s350 = smul.addr %s349, 2048
        %s351 = scalar_lea.vmem [#allocation6], %s350
        // Predicated region
        $region45: #{tpu_custom_call.1} parent=39 // pred_check
          %p352 = pneg %p92
        $region46: #{tpu_custom_call.1} parent=39 // pred_check_branch
          %354 = sbr.rel (%p352) target = $region48
        $region47: #{tpu_custom_call.1} parent=39 // pred_region
          %355 = dma.done %s348, 32768
        $region48: #{tpu_custom_call.1} parent=39 // pred_fallthru
          _
        %s356 = sand.u32 %s31, 1
        %s357 = scalar_lea.sflag [#allocation7], %s356
        %s358 = sand.u32 %s105, 1
        %s359 = smul.addr %s358, 4
        %s360 = scalar_lea.vmem [#allocation8], %s359
        // Predicated region
        $region49: #{tpu_custom_call.1} parent=39 // pred_check
          %p361 = pneg %p118
        $region50: #{tpu_custom_call.1} parent=39 // pred_check_branch
          %363 = sbr.rel (%p361) target = $region52
        $region51: #{tpu_custom_call.1} parent=39 // pred_region
          %364 = dma.done %s357, 64
        $region52: #{tpu_custom_call.1} parent=39 // pred_fallthru
          _
        %s365 = sand.u32 %s31, 1
        %s366 = scalar_lea.sflag [#allocation10], %s365
        %s367 = sand.u32 %s131, 1
        %s368 = smul.addr %s367, 8
        %s369 = scalar_lea.vmem [#allocation9], %s368
        // Predicated region
        $region53: #{tpu_custom_call.1} parent=39 // pred_check
          %p370 = pneg %p144
        $region54: #{tpu_custom_call.1} parent=39 // pred_check_branch
          %372 = sbr.rel (%p370) target = $region56
        $region55: #{tpu_custom_call.1} parent=39 // pred_region
          %373 = dma.done %s366, 128
        $region56: #{tpu_custom_call.1} parent=39 // pred_fallthru
          _
        %s374 = sand.u32 %s31, 1
        %s375 = scalar_lea.sflag [#allocation10], %s374
        %s376 = sand.u32 %s157, 1
        %s377 = smul.addr %s376, 8
        %s378 = scalar_lea.vmem [#allocation11], %s377
        // Predicated region
        $region57: #{tpu_custom_call.1} parent=39 // pred_check
          %p379 = pneg %p170
        $region58: #{tpu_custom_call.1} parent=39 // pred_check_branch
          %381 = sbr.rel (%p379) target = $region60
        $region59: #{tpu_custom_call.1} parent=39 // pred_region
          %382 = dma.done %s375, 128
        $region60: #{tpu_custom_call.1} parent=39 // pred_fallthru
          _
        %p383 = pneg %p64
        %p384 = pneg %p61
        %s385 = sand.u32 %s31, 1
        %s386 = scalar_lea.sflag [#allocation7], %s385
        %s387 = sand.u32 %s79, 1
        %s388 = smul.addr %s387, 2048
        %s389 = scalar_lea.vmem [#allocation6], %s388
        %p390 = pneg %p92
        %p391 = pneg %p89
        %s392 = sand.u32 %s31, 1
        %s393 = scalar_lea.sflag [#allocation7], %s392
        %s394 = sand.u32 %s105, 1
        %s395 = smul.addr %s394, 4
        %s396 = scalar_lea.vmem [#allocation8], %s395
        %p397 = pneg %p118
        %p398 = pneg %p115
        %s399 = sand.u32 %s31, 1
        %s400 = scalar_lea.sflag [#allocation10], %s399
        %s401 = sand.u32 %s131, 1
        %s402 = smul.addr %s401, 8
        %s403 = scalar_lea.vmem [#allocation9], %s402
        %p404 = pneg %p144
        %p405 = pneg %p141
        %s406 = sand.u32 %s31, 1
        %s407 = scalar_lea.sflag [#allocation10], %s406
        %s408 = sand.u32 %s157, 1
        %s409 = smul.addr %s408, 8
        %s410 = scalar_lea.vmem [#allocation11], %s409
        %p411 = pneg %p170
        %p412 = pneg %p167
        %p413 = pneg %p196
        %p414 = pneg %p193
        %s415 = sand.u32 %s183, 1
        %s416 = scalar_lea.sflag [#allocation5], %s415
        %s417 = sand.u32 %s183, 1
        %s418 = smul.addr %s417, 8
        %s419 = scalar_lea.vmem [#allocation12], %s418
        %p420 = pneg %p222
        %p421 = pneg %p219
        %s422 = sand.u32 %s209, 1
        %s423 = scalar_lea.sflag [#allocation14], %s422
        %s424 = sand.u32 %s209, 1
        %s425 = smul.addr %s424, 8
        %s426 = scalar_lea.vmem [#allocation13], %s425
        %s427 = smul.u32 8, %s36
        %s428 = smul.u32 128, %s36
        %s429 = smul.u32 4, %s35
        %s430 = smul.u32 4, %s35
        %s431 = smul.u32 4, %s35
        %s432 = smul.u32 4, %s35
        %s433 = smul.u32 4, %s35
        %s434 = smul.u32 4, %s35
        %p435 = scmp.eq.s32.totalorder %s36, 0
        // Predicated region
        $region61: #{tpu_custom_call.1} parent=39 // pred_check
          %p436 = pneg %p435
        $region62: #{tpu_custom_call.1} parent=39 // pred_check_branch
          %438 = sbr.rel (%p436) target = $region64
        $region63: #{tpu_custom_call.1} parent=39 // pred_region
          %439 = vst [vmem:[#allocation2] sm:$0xff] 0.0
        $region64: #{tpu_custom_call.1} parent=39 // pred_fallthru
          _
        %v440 = vld [vmem:[#allocation2] sm:$0xff]
        %v441 = vld [vmem:[#allocation3] sm:$0xff]
        %v442 = vld [vmem:[%s351] sm:$0xff]
        %v443 = vld [vmem:[%s351 + $0x8] sm:$0xff]
        %v444 = vld [vmem:[%s351 + $0x10] sm:$0xff]
        %v445 = vld [vmem:[%s351 + $0x18] sm:$0xff]
        %v446 = vld [vmem:[%s351 + $0x20] sm:$0xff]
        %v447 = vld [vmem:[%s351 + $0x28] sm:$0xff]
        %v448 = vld [vmem:[%s351 + $0x30] sm:$0xff]
        %v449 = vld [vmem:[%s351 + $0x38] sm:$0xff]
        %v450 = vld [vmem:[%s351 + $0x40] sm:$0xff]
        %v451 = vld [vmem:[%s351 + $0x48] sm:$0xff]
        %v452 = vld [vmem:[%s351 + $0x50] sm:$0xff]
        %v453 = vld [vmem:[%s351 + $0x58] sm:$0xff]
        %v454 = vld [vmem:[%s351 + $0x60] sm:$0xff]
        %v455 = vld [vmem:[%s351 + $0x68] sm:$0xff]
        %v456 = vld [vmem:[%s351 + $0x70] sm:$0xff]
        %v457 = vld [vmem:[%s351 + $0x78] sm:$0xff]
        %v458 = vld [vmem:[%s351 + $0x80] sm:$0xff]
        %v459 = vld [vmem:[%s351 + $0x88] sm:$0xff]
        %v460 = vld [vmem:[%s351 + $0x90] sm:$0xff]
        %v461 = vld [vmem:[%s351 + $0x98] sm:$0xff]
        %v462 = vld [vmem:[%s351 + $0xa0] sm:$0xff]
        %v463 = vld [vmem:[%s351 + $0xa8] sm:$0xff]
        %v464 = vld [vmem:[%s351 + $0xb0] sm:$0xff]
        %v465 = vld [vmem:[%s351 + $0xb8] sm:$0xff]
        %v466 = vld [vmem:[%s351 + $0xc0] sm:$0xff]
        %v467 = vld [vmem:[%s351 + $0xc8] sm:$0xff]
        %v468 = vld [vmem:[%s351 + $0xd0] sm:$0xff]
        %v469 = vld [vmem:[%s351 + $0xd8] sm:$0xff]
        %v470 = vld [vmem:[%s351 + $0xe0] sm:$0xff]
        %v471 = vld [vmem:[%s351 + $0xe8] sm:$0xff]
        %v472 = vld [vmem:[%s351 + $0xf0] sm:$0xff]
        %v473 = vld [vmem:[%s351 + $0xf8] sm:$0xff]
        %v474 = vld [vmem:[%s351 + $0x100] sm:$0xff]
        %v475 = vld [vmem:[%s351 + $0x108] sm:$0xff]
        %v476 = vld [vmem:[%s351 + $0x110] sm:$0xff]
        %v477 = vld [vmem:[%s351 + $0x118] sm:$0xff]
        %v478 = vld [vmem:[%s351 + $0x120] sm:$0xff]
        %v479 = vld [vmem:[%s351 + $0x128] sm:$0xff]
        %v480 = vld [vmem:[%s351 + $0x130] sm:$0xff]
        %v481 = vld [vmem:[%s351 + $0x138] sm:$0xff]
        %v482 = vld [vmem:[%s351 + $0x140] sm:$0xff]
        %v483 = vld [vmem:[%s351 + $0x148] sm:$0xff]
        %v484 = vld [vmem:[%s351 + $0x150] sm:$0xff]
        %v485 = vld [vmem:[%s351 + $0x158] sm:$0xff]
        %v486 = vld [vmem:[%s351 + $0x160] sm:$0xff]
        %v487 = vld [vmem:[%s351 + $0x168] sm:$0xff]
        %v488 = vld [vmem:[%s351 + $0x170] sm:$0xff]
        %v489 = vld [vmem:[%s351 + $0x178] sm:$0xff]
        %v490 = vld [vmem:[%s351 + $0x180] sm:$0xff]
        %v491 = vld [vmem:[%s351 + $0x188] sm:$0xff]
        %v492 = vld [vmem:[%s351 + $0x190] sm:$0xff]
        %v493 = vld [vmem:[%s351 + $0x198] sm:$0xff]
        %v494 = vld [vmem:[%s351 + $0x1a0] sm:$0xff]
        %v495 = vld [vmem:[%s351 + $0x1a8] sm:$0xff]
        %v496 = vld [vmem:[%s351 + $0x1b0] sm:$0xff]
        %v497 = vld [vmem:[%s351 + $0x1b8] sm:$0xff]
        %v498 = vld [vmem:[%s351 + $0x1c0] sm:$0xff]
        %v499 = vld [vmem:[%s351 + $0x1c8] sm:$0xff]
        %v500 = vld [vmem:[%s351 + $0x1d0] sm:$0xff]
        %v501 = vld [vmem:[%s351 + $0x1d8] sm:$0xff]
        %v502 = vld [vmem:[%s351 + $0x1e0] sm:$0xff]
        %v503 = vld [vmem:[%s351 + $0x1e8] sm:$0xff]
        %v504 = vld [vmem:[%s351 + $0x1f0] sm:$0xff]
        %v505 = vld [vmem:[%s351 + $0x1f8] sm:$0xff]
        %v506 = vld [vmem:[%s351 + $0x200] sm:$0xff]
        %v507 = vld [vmem:[%s351 + $0x208] sm:$0xff]
        %v508 = vld [vmem:[%s351 + $0x210] sm:$0xff]
        %v509 = vld [vmem:[%s351 + $0x218] sm:$0xff]
        %v510 = vld [vmem:[%s351 + $0x220] sm:$0xff]
        %v511 = vld [vmem:[%s351 + $0x228] sm:$0xff]
        %v512 = vld [vmem:[%s351 + $0x230] sm:$0xff]
        %v513 = vld [vmem:[%s351 + $0x238] sm:$0xff]
        %v514 = vld [vmem:[%s351 + $0x240] sm:$0xff]
        %v515 = vld [vmem:[%s351 + $0x248] sm:$0xff]
        %v516 = vld [vmem:[%s351 + $0x250] sm:$0xff]
        %v517 = vld [vmem:[%s351 + $0x258] sm:$0xff]
        %v518 = vld [vmem:[%s351 + $0x260] sm:$0xff]
        %v519 = vld [vmem:[%s351 + $0x268] sm:$0xff]
        %v520 = vld [vmem:[%s351 + $0x270] sm:$0xff]
        %v521 = vld [vmem:[%s351 + $0x278] sm:$0xff]
        %v522 = vld [vmem:[%s351 + $0x280] sm:$0xff]
        %v523 = vld [vmem:[%s351 + $0x288] sm:$0xff]
        %v524 = vld [vmem:[%s351 + $0x290] sm:$0xff]
        %v525 = vld [vmem:[%s351 + $0x298] sm:$0xff]
        %v526 = vld [vmem:[%s351 + $0x2a0] sm:$0xff]
        %v527 = vld [vmem:[%s351 + $0x2a8] sm:$0xff]
        %v528 = vld [vmem:[%s351 + $0x2b0] sm:$0xff]
        %v529 = vld [vmem:[%s351 + $0x2b8] sm:$0xff]
        %v530 = vld [vmem:[%s351 + $0x2c0] sm:$0xff]
        %v531 = vld [vmem:[%s351 + $0x2c8] sm:$0xff]
        %v532 = vld [vmem:[%s351 + $0x2d0] sm:$0xff]
        %v533 = vld [vmem:[%s351 + $0x2d8] sm:$0xff]
        %v534 = vld [vmem:[%s351 + $0x2e0] sm:$0xff]
        %v535 = vld [vmem:[%s351 + $0x2e8] sm:$0xff]
        %v536 = vld [vmem:[%s351 + $0x2f0] sm:$0xff]
        %v537 = vld [vmem:[%s351 + $0x2f8] sm:$0xff]
        %v538 = vld [vmem:[%s351 + $0x300] sm:$0xff]
        %v539 = vld [vmem:[%s351 + $0x308] sm:$0xff]
        %v540 = vld [vmem:[%s351 + $0x310] sm:$0xff]
        %v541 = vld [vmem:[%s351 + $0x318] sm:$0xff]
        %v542 = vld [vmem:[%s351 + $0x320] sm:$0xff]
        %v543 = vld [vmem:[%s351 + $0x328] sm:$0xff]
        %v544 = vld [vmem:[%s351 + $0x330] sm:$0xff]
        %v545 = vld [vmem:[%s351 + $0x338] sm:$0xff]
        %v546 = vld [vmem:[%s351 + $0x340] sm:$0xff]
        %v547 = vld [vmem:[%s351 + $0x348] sm:$0xff]
        %v548 = vld [vmem:[%s351 + $0x350] sm:$0xff]
        %v549 = vld [vmem:[%s351 + $0x358] sm:$0xff]
        %v550 = vld [vmem:[%s351 + $0x360] sm:$0xff]
        %v551 = vld [vmem:[%s351 + $0x368] sm:$0xff]
        %v552 = vld [vmem:[%s351 + $0x370] sm:$0xff]
        %v553 = vld [vmem:[%s351 + $0x378] sm:$0xff]
        %v554 = vld [vmem:[%s351 + $0x380] sm:$0xff]
        %v555 = vld [vmem:[%s351 + $0x388] sm:$0xff]
        %v556 = vld [vmem:[%s351 + $0x390] sm:$0xff]
        %v557 = vld [vmem:[%s351 + $0x398] sm:$0xff]
        %v558 = vld [vmem:[%s351 + $0x3a0] sm:$0xff]
        %v559 = vld [vmem:[%s351 + $0x3a8] sm:$0xff]
        %v560 = vld [vmem:[%s351 + $0x3b0] sm:$0xff]
        %v561 = vld [vmem:[%s351 + $0x3b8] sm:$0xff]
        %v562 = vld [vmem:[%s351 + $0x3c0] sm:$0xff]
        %v563 = vld [vmem:[%s351 + $0x3c8] sm:$0xff]
        %v564 = vld [vmem:[%s351 + $0x3d0] sm:$0xff]
        %v565 = vld [vmem:[%s351 + $0x3d8] sm:$0xff]
        %v566 = vld [vmem:[%s351 + $0x3e0] sm:$0xff]
        %v567 = vld [vmem:[%s351 + $0x3e8] sm:$0xff]
        %v568 = vld [vmem:[%s351 + $0x3f0] sm:$0xff]
        %v569 = vld [vmem:[%s351 + $0x3f8] sm:$0xff]
        %v570 = vld [vmem:[%s351 + $0x400] sm:$0xff]
        %v571 = vld [vmem:[%s351 + $0x408] sm:$0xff]
        %v572 = vld [vmem:[%s351 + $0x410] sm:$0xff]
        %v573 = vld [vmem:[%s351 + $0x418] sm:$0xff]
        %v574 = vld [vmem:[%s351 + $0x420] sm:$0xff]
        %v575 = vld [vmem:[%s351 + $0x428] sm:$0xff]
        %v576 = vld [vmem:[%s351 + $0x430] sm:$0xff]
        %v577 = vld [vmem:[%s351 + $0x438] sm:$0xff]
        %v578 = vld [vmem:[%s351 + $0x440] sm:$0xff]
        %v579 = vld [vmem:[%s351 + $0x448] sm:$0xff]
        %v580 = vld [vmem:[%s351 + $0x450] sm:$0xff]
        %v581 = vld [vmem:[%s351 + $0x458] sm:$0xff]
        %v582 = vld [vmem:[%s351 + $0x460] sm:$0xff]
        %v583 = vld [vmem:[%s351 + $0x468] sm:$0xff]
        %v584 = vld [vmem:[%s351 + $0x470] sm:$0xff]
        %v585 = vld [vmem:[%s351 + $0x478] sm:$0xff]
        %v586 = vld [vmem:[%s351 + $0x480] sm:$0xff]
        %v587 = vld [vmem:[%s351 + $0x488] sm:$0xff]
        %v588 = vld [vmem:[%s351 + $0x490] sm:$0xff]
        %v589 = vld [vmem:[%s351 + $0x498] sm:$0xff]
        %v590 = vld [vmem:[%s351 + $0x4a0] sm:$0xff]
        %v591 = vld [vmem:[%s351 + $0x4a8] sm:$0xff]
        %v592 = vld [vmem:[%s351 + $0x4b0] sm:$0xff]
        %v593 = vld [vmem:[%s351 + $0x4b8] sm:$0xff]
        %v594 = vld [vmem:[%s351 + $0x4c0] sm:$0xff]
        %v595 = vld [vmem:[%s351 + $0x4c8] sm:$0xff]
        %v596 = vld [vmem:[%s351 + $0x4d0] sm:$0xff]
        %v597 = vld [vmem:[%s351 + $0x4d8] sm:$0xff]
        %v598 = vld [vmem:[%s351 + $0x4e0] sm:$0xff]
        %v599 = vld [vmem:[%s351 + $0x4e8] sm:$0xff]
        %v600 = vld [vmem:[%s351 + $0x4f0] sm:$0xff]
        %v601 = vld [vmem:[%s351 + $0x4f8] sm:$0xff]
        %v602 = vld [vmem:[%s351 + $0x500] sm:$0xff]
        %v603 = vld [vmem:[%s351 + $0x508] sm:$0xff]
        %v604 = vld [vmem:[%s351 + $0x510] sm:$0xff]
        %v605 = vld [vmem:[%s351 + $0x518] sm:$0xff]
        %v606 = vld [vmem:[%s351 + $0x520] sm:$0xff]
        %v607 = vld [vmem:[%s351 + $0x528] sm:$0xff]
        %v608 = vld [vmem:[%s351 + $0x530] sm:$0xff]
        %v609 = vld [vmem:[%s351 + $0x538] sm:$0xff]
        %v610 = vld [vmem:[%s351 + $0x540] sm:$0xff]
        %v611 = vld [vmem:[%s351 + $0x548] sm:$0xff]
        %v612 = vld [vmem:[%s351 + $0x550] sm:$0xff]
        %v613 = vld [vmem:[%s351 + $0x558] sm:$0xff]
        %v614 = vld [vmem:[%s351 + $0x560] sm:$0xff]
        %v615 = vld [vmem:[%s351 + $0x568] sm:$0xff]
        %v616 = vld [vmem:[%s351 + $0x570] sm:$0xff]
        %v617 = vld [vmem:[%s351 + $0x578] sm:$0xff]
        %v618 = vld [vmem:[%s351 + $0x580] sm:$0xff]
        %v619 = vld [vmem:[%s351 + $0x588] sm:$0xff]
        %v620 = vld [vmem:[%s351 + $0x590] sm:$0xff]
        %v621 = vld [vmem:[%s351 + $0x598] sm:$0xff]
        %v622 = vld [vmem:[%s351 + $0x5a0] sm:$0xff]
        %v623 = vld [vmem:[%s351 + $0x5a8] sm:$0xff]
        %v624 = vld [vmem:[%s351 + $0x5b0] sm:$0xff]
        %v625 = vld [vmem:[%s351 + $0x5b8] sm:$0xff]
        %v626 = vld [vmem:[%s351 + $0x5c0] sm:$0xff]
        %v627 = vld [vmem:[%s351 + $0x5c8] sm:$0xff]
        %v628 = vld [vmem:[%s351 + $0x5d0] sm:$0xff]
        %v629 = vld [vmem:[%s351 + $0x5d8] sm:$0xff]
        %v630 = vld [vmem:[%s351 + $0x5e0] sm:$0xff]
        %v631 = vld [vmem:[%s351 + $0x5e8] sm:$0xff]
        %v632 = vld [vmem:[%s351 + $0x5f0] sm:$0xff]
        %v633 = vld [vmem:[%s351 + $0x5f8] sm:$0xff]
        %v634 = vld [vmem:[%s351 + $0x600] sm:$0xff]
        %v635 = vld [vmem:[%s351 + $0x608] sm:$0xff]
        %v636 = vld [vmem:[%s351 + $0x610] sm:$0xff]
        %v637 = vld [vmem:[%s351 + $0x618] sm:$0xff]
        %v638 = vld [vmem:[%s351 + $0x620] sm:$0xff]
        %v639 = vld [vmem:[%s351 + $0x628] sm:$0xff]
        %v640 = vld [vmem:[%s351 + $0x630] sm:$0xff]
        %v641 = vld [vmem:[%s351 + $0x638] sm:$0xff]
        %v642 = vld [vmem:[%s351 + $0x640] sm:$0xff]
        %v643 = vld [vmem:[%s351 + $0x648] sm:$0xff]
        %v644 = vld [vmem:[%s351 + $0x650] sm:$0xff]
        %v645 = vld [vmem:[%s351 + $0x658] sm:$0xff]
        %v646 = vld [vmem:[%s351 + $0x660] sm:$0xff]
        %v647 = vld [vmem:[%s351 + $0x668] sm:$0xff]
        %v648 = vld [vmem:[%s351 + $0x670] sm:$0xff]
        %v649 = vld [vmem:[%s351 + $0x678] sm:$0xff]
        %v650 = vld [vmem:[%s351 + $0x680] sm:$0xff]
        %v651 = vld [vmem:[%s351 + $0x688] sm:$0xff]
        %v652 = vld [vmem:[%s351 + $0x690] sm:$0xff]
        %v653 = vld [vmem:[%s351 + $0x698] sm:$0xff]
        %v654 = vld [vmem:[%s351 + $0x6a0] sm:$0xff]
        %v655 = vld [vmem:[%s351 + $0x6a8] sm:$0xff]
        %v656 = vld [vmem:[%s351 + $0x6b0] sm:$0xff]
        %v657 = vld [vmem:[%s351 + $0x6b8] sm:$0xff]
        %v658 = vld [vmem:[%s351 + $0x6c0] sm:$0xff]
        %v659 = vld [vmem:[%s351 + $0x6c8] sm:$0xff]
        %v660 = vld [vmem:[%s351 + $0x6d0] sm:$0xff]
        %v661 = vld [vmem:[%s351 + $0x6d8] sm:$0xff]
        %v662 = vld [vmem:[%s351 + $0x6e0] sm:$0xff]
        %v663 = vld [vmem:[%s351 + $0x6e8] sm:$0xff]
        %v664 = vld [vmem:[%s351 + $0x6f0] sm:$0xff]
        %v665 = vld [vmem:[%s351 + $0x6f8] sm:$0xff]
        %v666 = vld [vmem:[%s351 + $0x700] sm:$0xff]
        %v667 = vld [vmem:[%s351 + $0x708] sm:$0xff]
        %v668 = vld [vmem:[%s351 + $0x710] sm:$0xff]
        %v669 = vld [vmem:[%s351 + $0x718] sm:$0xff]
        %v670 = vld [vmem:[%s351 + $0x720] sm:$0xff]
        %v671 = vld [vmem:[%s351 + $0x728] sm:$0xff]
        %v672 = vld [vmem:[%s351 + $0x730] sm:$0xff]
        %v673 = vld [vmem:[%s351 + $0x738] sm:$0xff]
        %v674 = vld [vmem:[%s351 + $0x740] sm:$0xff]
        %v675 = vld [vmem:[%s351 + $0x748] sm:$0xff]
        %v676 = vld [vmem:[%s351 + $0x750] sm:$0xff]
        %v677 = vld [vmem:[%s351 + $0x758] sm:$0xff]
        %v678 = vld [vmem:[%s351 + $0x760] sm:$0xff]
        %v679 = vld [vmem:[%s351 + $0x768] sm:$0xff]
        %v680 = vld [vmem:[%s351 + $0x770] sm:$0xff]
        %v681 = vld [vmem:[%s351 + $0x778] sm:$0xff]
        %v682 = vld [vmem:[%s351 + $0x780] sm:$0xff]
        %v683 = vld [vmem:[%s351 + $0x788] sm:$0xff]
        %v684 = vld [vmem:[%s351 + $0x790] sm:$0xff]
        %v685 = vld [vmem:[%s351 + $0x798] sm:$0xff]
        %v686 = vld [vmem:[%s351 + $0x7a0] sm:$0xff]
        %v687 = vld [vmem:[%s351 + $0x7a8] sm:$0xff]
        %v688 = vld [vmem:[%s351 + $0x7b0] sm:$0xff]
        %v689 = vld [vmem:[%s351 + $0x7b8] sm:$0xff]
        %v690 = vld [vmem:[%s351 + $0x7c0] sm:$0xff]
        %v691 = vld [vmem:[%s351 + $0x7c8] sm:$0xff]
        %v692 = vld [vmem:[%s351 + $0x7d0] sm:$0xff]
        %v693 = vld [vmem:[%s351 + $0x7d8] sm:$0xff]
        %v694 = vld [vmem:[%s351 + $0x7e0] sm:$0xff]
        %v695 = vld [vmem:[%s351 + $0x7e8] sm:$0xff]
        %v696 = vld [vmem:[%s351 + $0x7f0] sm:$0xff]
        %v697 = vld [vmem:[%s351 + $0x7f8] sm:$0xff]
        %v699 = vcombine.high %v441, %v441
        %v701 = vunpack.c.l.s4 1966171168
        %v702 = vunpack.c.0.s8 %v701
        %v703 = vlaneseq
        %v704 = vshrl.u32 %v703, 7
        %v705 = vsub.s32 %v702, %v704
        %v706 = vrot.slane %v441, %v705
        %v708 = vunpack.c.l.s4 1966171168
        %v709 = vunpack.c.0.s8 %v708
        %v710 = vlaneseq
        %v711 = vshrl.u32 %v710, 7
        %v712 = vsub.s32 %v709, %v711
        %v713 = vrot.slane %v699, %v712
        %v714 = vcombine.high %v706, %v706
        %v715 = vcombine.high %v713, %v713
        %v717 = vunpack.c.l.s4 1966171168
        %v718 = vunpack.c.0.s8 %v717
        %v719 = vlaneseq
        %v720 = vshrl.u32 %v719, 7
        %v721 = vsub.s32 %v718, %v720
        %v722 = vrot.slane %v706, %v721
        %v724 = vunpack.c.l.s4 1966171168
        %v725 = vunpack.c.0.s8 %v724
        %v726 = vlaneseq
        %v727 = vshrl.u32 %v726, 7
        %v728 = vsub.s32 %v725, %v727
        %v729 = vrot.slane %v713, %v728
        %v731 = vunpack.c.l.s4 1966171168
        %v732 = vunpack.c.0.s8 %v731
        %v733 = vlaneseq
        %v734 = vshrl.u32 %v733, 7
        %v735 = vsub.s32 %v732, %v734
        %v736 = vrot.slane %v714, %v735
        %v738 = vunpack.c.l.s4 1966171168
        %v739 = vunpack.c.0.s8 %v738
        %v740 = vlaneseq
        %v741 = vshrl.u32 %v740, 7
        %v742 = vsub.s32 %v739, %v741
        %v743 = vrot.slane %v715, %v742
        %v744 = vcombine.high %v722, %v722
        %v745 = vcombine.high %v729, %v729
        %v746 = vcombine.high %v736, %v736
        %v747 = vcombine.high %v743, %v743
        %v1012 = vunpack.c.l.b16 %v442
        %v1013 = vunpack.c.h.b16 %v442
        %v1014 = vunpack.c.l.b16 %v443
        %v1015 = vunpack.c.h.b16 %v443
        %v1016 = vunpack.c.l.b16 %v444
        %v1017 = vunpack.c.h.b16 %v444
        %v1018 = vunpack.c.l.b16 %v445
        %v1019 = vunpack.c.h.b16 %v445
        %v1020 = vunpack.c.l.b16 %v446
        %v1021 = vunpack.c.h.b16 %v446
        %v1022 = vunpack.c.l.b16 %v447
        %v1023 = vunpack.c.h.b16 %v447
        %v1024 = vunpack.c.l.b16 %v448
        %v1025 = vunpack.c.h.b16 %v448
        %v1026 = vunpack.c.l.b16 %v449
        %v1027 = vunpack.c.h.b16 %v449
        %v1028 = vunpack.c.l.b16 %v450
        %v1029 = vunpack.c.h.b16 %v450
        %v1030 = vunpack.c.l.b16 %v451
        %v1031 = vunpack.c.h.b16 %v451
        %v1032 = vunpack.c.l.b16 %v452
        %v1033 = vunpack.c.h.b16 %v452
        %v1034 = vunpack.c.l.b16 %v453
        %v1035 = vunpack.c.h.b16 %v453
        %v1036 = vunpack.c.l.b16 %v454
        %v1037 = vunpack.c.h.b16 %v454
        %v1038 = vunpack.c.l.b16 %v455
        %v1039 = vunpack.c.h.b16 %v455
        %v1040 = vunpack.c.l.b16 %v456
        %v1041 = vunpack.c.h.b16 %v456
        %v1042 = vunpack.c.l.b16 %v457
        %v1043 = vunpack.c.h.b16 %v457
        %v1044 = vunpack.c.l.b16 %v458
        %v1045 = vunpack.c.h.b16 %v458
        %v1046 = vunpack.c.l.b16 %v459
        %v1047 = vunpack.c.h.b16 %v459
        %v1048 = vunpack.c.l.b16 %v460
        %v1049 = vunpack.c.h.b16 %v460
        %v1050 = vunpack.c.l.b16 %v461
        %v1051 = vunpack.c.h.b16 %v461
        %v1052 = vunpack.c.l.b16 %v462
        %v1053 = vunpack.c.h.b16 %v462
        %v1054 = vunpack.c.l.b16 %v463
        %v1055 = vunpack.c.h.b16 %v463
        %v1056 = vunpack.c.l.b16 %v464
        %v1057 = vunpack.c.h.b16 %v464
        %v1058 = vunpack.c.l.b16 %v465
        %v1059 = vunpack.c.h.b16 %v465
        %v1060 = vunpack.c.l.b16 %v466
        %v1061 = vunpack.c.h.b16 %v466
        %v1062 = vunpack.c.l.b16 %v467
        %v1063 = vunpack.c.h.b16 %v467
        %v1064 = vunpack.c.l.b16 %v468
        %v1065 = vunpack.c.h.b16 %v468
        %v1066 = vunpack.c.l.b16 %v469
        %v1067 = vunpack.c.h.b16 %v469
        %v1068 = vunpack.c.l.b16 %v470
        %v1069 = vunpack.c.h.b16 %v470
        %v1070 = vunpack.c.l.b16 %v471
        %v1071 = vunpack.c.h.b16 %v471
        %v1072 = vunpack.c.l.b16 %v472
        %v1073 = vunpack.c.h.b16 %v472
        %v1074 = vunpack.c.l.b16 %v473
        %v1075 = vunpack.c.h.b16 %v473
        %v1076 = vunpack.c.l.b16 %v474
        %v1077 = vunpack.c.h.b16 %v474
        %v1078 = vunpack.c.l.b16 %v475
        %v1079 = vunpack.c.h.b16 %v475
        %v1080 = vunpack.c.l.b16 %v476
        %v1081 = vunpack.c.h.b16 %v476
        %v1082 = vunpack.c.l.b16 %v477
        %v1083 = vunpack.c.h.b16 %v477
        %v1084 = vunpack.c.l.b16 %v478
        %v1085 = vunpack.c.h.b16 %v478
        %v1086 = vunpack.c.l.b16 %v479
        %v1087 = vunpack.c.h.b16 %v479
        %v1088 = vunpack.c.l.b16 %v480
        %v1089 = vunpack.c.h.b16 %v480
        %v1090 = vunpack.c.l.b16 %v481
        %v1091 = vunpack.c.h.b16 %v481
        %v1092 = vunpack.c.l.b16 %v482
        %v1093 = vunpack.c.h.b16 %v482
        %v1094 = vunpack.c.l.b16 %v483
        %v1095 = vunpack.c.h.b16 %v483
        %v1096 = vunpack.c.l.b16 %v484
        %v1097 = vunpack.c.h.b16 %v484
        %v1098 = vunpack.c.l.b16 %v485
        %v1099 = vunpack.c.h.b16 %v485
        %v1100 = vunpack.c.l.b16 %v486
        %v1101 = vunpack.c.h.b16 %v486
        %v1102 = vunpack.c.l.b16 %v487
        %v1103 = vunpack.c.h.b16 %v487
        %v1104 = vunpack.c.l.b16 %v488
        %v1105 = vunpack.c.h.b16 %v488
        %v1106 = vunpack.c.l.b16 %v489
        %v1107 = vunpack.c.h.b16 %v489
        %v1108 = vunpack.c.l.b16 %v490
        %v1109 = vunpack.c.h.b16 %v490
        %v1110 = vunpack.c.l.b16 %v491
        %v1111 = vunpack.c.h.b16 %v491
        %v1112 = vunpack.c.l.b16 %v492
        %v1113 = vunpack.c.h.b16 %v492
        %v1114 = vunpack.c.l.b16 %v493
        %v1115 = vunpack.c.h.b16 %v493
        %v1116 = vunpack.c.l.b16 %v494
        %v1117 = vunpack.c.h.b16 %v494
        %v1118 = vunpack.c.l.b16 %v495
        %v1119 = vunpack.c.h.b16 %v495
        %v1120 = vunpack.c.l.b16 %v496
        %v1121 = vunpack.c.h.b16 %v496
        %v1122 = vunpack.c.l.b16 %v497
        %v1123 = vunpack.c.h.b16 %v497
        %v1124 = vunpack.c.l.b16 %v498
        %v1125 = vunpack.c.h.b16 %v498
        %v1126 = vunpack.c.l.b16 %v499
        %v1127 = vunpack.c.h.b16 %v499
        %v1128 = vunpack.c.l.b16 %v500
        %v1129 = vunpack.c.h.b16 %v500
        %v1130 = vunpack.c.l.b16 %v501
        %v1131 = vunpack.c.h.b16 %v501
        %v1132 = vunpack.c.l.b16 %v502
        %v1133 = vunpack.c.h.b16 %v502
        %v1134 = vunpack.c.l.b16 %v503
        %v1135 = vunpack.c.h.b16 %v503
        %v1136 = vunpack.c.l.b16 %v504
        %v1137 = vunpack.c.h.b16 %v504
        %v1138 = vunpack.c.l.b16 %v505
        %v1139 = vunpack.c.h.b16 %v505
        %v1140 = vunpack.c.l.b16 %v506
        %v1141 = vunpack.c.h.b16 %v506
        %v1142 = vunpack.c.l.b16 %v507
        %v1143 = vunpack.c.h.b16 %v507
        %v1144 = vunpack.c.l.b16 %v508
        %v1145 = vunpack.c.h.b16 %v508
        %v1146 = vunpack.c.l.b16 %v509
        %v1147 = vunpack.c.h.b16 %v509
        %v1148 = vunpack.c.l.b16 %v510
        %v1149 = vunpack.c.h.b16 %v510
        %v1150 = vunpack.c.l.b16 %v511
        %v1151 = vunpack.c.h.b16 %v511
        %v1152 = vunpack.c.l.b16 %v512
        %v1153 = vunpack.c.h.b16 %v512
        %v1154 = vunpack.c.l.b16 %v513
        %v1155 = vunpack.c.h.b16 %v513
        %v1156 = vunpack.c.l.b16 %v514
        %v1157 = vunpack.c.h.b16 %v514
        %v1158 = vunpack.c.l.b16 %v515
        %v1159 = vunpack.c.h.b16 %v515
        %v1160 = vunpack.c.l.b16 %v516
        %v1161 = vunpack.c.h.b16 %v516
        %v1162 = vunpack.c.l.b16 %v517
        %v1163 = vunpack.c.h.b16 %v517
        %v1164 = vunpack.c.l.b16 %v518
        %v1165 = vunpack.c.h.b16 %v518
        %v1166 = vunpack.c.l.b16 %v519
        %v1167 = vunpack.c.h.b16 %v519
        %v1168 = vunpack.c.l.b16 %v520
        %v1169 = vunpack.c.h.b16 %v520
        %v1170 = vunpack.c.l.b16 %v521
        %v1171 = vunpack.c.h.b16 %v521
        %v1172 = vunpack.c.l.b16 %v522
        %v1173 = vunpack.c.h.b16 %v522
        %v1174 = vunpack.c.l.b16 %v523
        %v1175 = vunpack.c.h.b16 %v523
        %v1176 = vunpack.c.l.b16 %v524
        %v1177 = vunpack.c.h.b16 %v524
        %v1178 = vunpack.c.l.b16 %v525
        %v1179 = vunpack.c.h.b16 %v525
        %v1180 = vunpack.c.l.b16 %v526
        %v1181 = vunpack.c.h.b16 %v526
        %v1182 = vunpack.c.l.b16 %v527
        %v1183 = vunpack.c.h.b16 %v527
        %v1184 = vunpack.c.l.b16 %v528
        %v1185 = vunpack.c.h.b16 %v528
        %v1186 = vunpack.c.l.b16 %v529
        %v1187 = vunpack.c.h.b16 %v529
        %v1188 = vunpack.c.l.b16 %v530
        %v1189 = vunpack.c.h.b16 %v530
        %v1190 = vunpack.c.l.b16 %v531
        %v1191 = vunpack.c.h.b16 %v531
        %v1192 = vunpack.c.l.b16 %v532
        %v1193 = vunpack.c.h.b16 %v532
        %v1194 = vunpack.c.l.b16 %v533
        %v1195 = vunpack.c.h.b16 %v533
        %v1196 = vunpack.c.l.b16 %v534
        %v1197 = vunpack.c.h.b16 %v534
        %v1198 = vunpack.c.l.b16 %v535
        %v1199 = vunpack.c.h.b16 %v535
        %v1200 = vunpack.c.l.b16 %v536
        %v1201 = vunpack.c.h.b16 %v536
        %v1202 = vunpack.c.l.b16 %v537
        %v1203 = vunpack.c.h.b16 %v537
        %v1204 = vunpack.c.l.b16 %v538
        %v1205 = vunpack.c.h.b16 %v538
        %v1206 = vunpack.c.l.b16 %v539
        %v1207 = vunpack.c.h.b16 %v539
        %v1208 = vunpack.c.l.b16 %v540
        %v1209 = vunpack.c.h.b16 %v540
        %v1210 = vunpack.c.l.b16 %v541
        %v1211 = vunpack.c.h.b16 %v541
        %v1212 = vunpack.c.l.b16 %v542
        %v1213 = vunpack.c.h.b16 %v542
        %v1214 = vunpack.c.l.b16 %v543
        %v1215 = vunpack.c.h.b16 %v543
        %v1216 = vunpack.c.l.b16 %v544
        %v1217 = vunpack.c.h.b16 %v544
        %v1218 = vunpack.c.l.b16 %v545
        %v1219 = vunpack.c.h.b16 %v545
        %v1220 = vunpack.c.l.b16 %v546
        %v1221 = vunpack.c.h.b16 %v546
        %v1222 = vunpack.c.l.b16 %v547
        %v1223 = vunpack.c.h.b16 %v547
        %v1224 = vunpack.c.l.b16 %v548
        %v1225 = vunpack.c.h.b16 %v548
        %v1226 = vunpack.c.l.b16 %v549
        %v1227 = vunpack.c.h.b16 %v549
        %v1228 = vunpack.c.l.b16 %v550
        %v1229 = vunpack.c.h.b16 %v550
        %v1230 = vunpack.c.l.b16 %v551
        %v1231 = vunpack.c.h.b16 %v551
        %v1232 = vunpack.c.l.b16 %v552
        %v1233 = vunpack.c.h.b16 %v552
        %v1234 = vunpack.c.l.b16 %v553
        %v1235 = vunpack.c.h.b16 %v553
        %v1236 = vunpack.c.l.b16 %v554
        %v1237 = vunpack.c.h.b16 %v554
        %v1238 = vunpack.c.l.b16 %v555
        %v1239 = vunpack.c.h.b16 %v555
        %v1240 = vunpack.c.l.b16 %v556
        %v1241 = vunpack.c.h.b16 %v556
        %v1242 = vunpack.c.l.b16 %v557
        %v1243 = vunpack.c.h.b16 %v557
        %v1244 = vunpack.c.l.b16 %v558
        %v1245 = vunpack.c.h.b16 %v558
        %v1246 = vunpack.c.l.b16 %v559
        %v1247 = vunpack.c.h.b16 %v559
        %v1248 = vunpack.c.l.b16 %v560
        %v1249 = vunpack.c.h.b16 %v560
        %v1250 = vunpack.c.l.b16 %v561
        %v1251 = vunpack.c.h.b16 %v561
        %v1252 = vunpack.c.l.b16 %v562
        %v1253 = vunpack.c.h.b16 %v562
        %v1254 = vunpack.c.l.b16 %v563
        %v1255 = vunpack.c.h.b16 %v563
        %v1256 = vunpack.c.l.b16 %v564
        %v1257 = vunpack.c.h.b16 %v564
        %v1258 = vunpack.c.l.b16 %v565
        %v1259 = vunpack.c.h.b16 %v565
        %v1260 = vunpack.c.l.b16 %v566
        %v1261 = vunpack.c.h.b16 %v566
        %v1262 = vunpack.c.l.b16 %v567
        %v1263 = vunpack.c.h.b16 %v567
        %v1264 = vunpack.c.l.b16 %v568
        %v1265 = vunpack.c.h.b16 %v568
        %v1266 = vunpack.c.l.b16 %v569
        %v1267 = vunpack.c.h.b16 %v569
        %v1268 = vunpack.c.l.b16 %v570
        %v1269 = vunpack.c.h.b16 %v570
        %v1270 = vunpack.c.l.b16 %v571
        %v1271 = vunpack.c.h.b16 %v571
        %v1272 = vunpack.c.l.b16 %v572
        %v1273 = vunpack.c.h.b16 %v572
        %v1274 = vunpack.c.l.b16 %v573
        %v1275 = vunpack.c.h.b16 %v573
        %v1276 = vunpack.c.l.b16 %v574
        %v1277 = vunpack.c.h.b16 %v574
        %v1278 = vunpack.c.l.b16 %v575
        %v1279 = vunpack.c.h.b16 %v575
        %v1280 = vunpack.c.l.b16 %v576
        %v1281 = vunpack.c.h.b16 %v576
        %v1282 = vunpack.c.l.b16 %v577
        %v1283 = vunpack.c.h.b16 %v577
        %v1284 = vunpack.c.l.b16 %v578
        %v1285 = vunpack.c.h.b16 %v578
        %v1286 = vunpack.c.l.b16 %v579
        %v1287 = vunpack.c.h.b16 %v579
        %v1288 = vunpack.c.l.b16 %v580
        %v1289 = vunpack.c.h.b16 %v580
        %v1290 = vunpack.c.l.b16 %v581
        %v1291 = vunpack.c.h.b16 %v581
        %v1292 = vunpack.c.l.b16 %v582
        %v1293 = vunpack.c.h.b16 %v582
        %v1294 = vunpack.c.l.b16 %v583
        %v1295 = vunpack.c.h.b16 %v583
        %v1296 = vunpack.c.l.b16 %v584
        %v1297 = vunpack.c.h.b16 %v584
        %v1298 = vunpack.c.l.b16 %v585
        %v1299 = vunpack.c.h.b16 %v585
        %v1300 = vunpack.c.l.b16 %v586
        %v1301 = vunpack.c.h.b16 %v586
        %v1302 = vunpack.c.l.b16 %v587
        %v1303 = vunpack.c.h.b16 %v587
        %v1304 = vunpack.c.l.b16 %v588
        %v1305 = vunpack.c.h.b16 %v588
        %v1306 = vunpack.c.l.b16 %v589
        %v1307 = vunpack.c.h.b16 %v589
        %v1308 = vunpack.c.l.b16 %v590
        %v1309 = vunpack.c.h.b16 %v590
        %v1310 = vunpack.c.l.b16 %v591
        %v1311 = vunpack.c.h.b16 %v591
        %v1312 = vunpack.c.l.b16 %v592
        %v1313 = vunpack.c.h.b16 %v592
        %v1314 = vunpack.c.l.b16 %v593
        %v1315 = vunpack.c.h.b16 %v593
        %v1316 = vunpack.c.l.b16 %v594
        %v1317 = vunpack.c.h.b16 %v594
        %v1318 = vunpack.c.l.b16 %v595
        %v1319 = vunpack.c.h.b16 %v595
        %v1320 = vunpack.c.l.b16 %v596
        %v1321 = vunpack.c.h.b16 %v596
        %v1322 = vunpack.c.l.b16 %v597
        %v1323 = vunpack.c.h.b16 %v597
        %v1324 = vunpack.c.l.b16 %v598
        %v1325 = vunpack.c.h.b16 %v598
        %v1326 = vunpack.c.l.b16 %v599
        %v1327 = vunpack.c.h.b16 %v599
        %v1328 = vunpack.c.l.b16 %v600
        %v1329 = vunpack.c.h.b16 %v600
        %v1330 = vunpack.c.l.b16 %v601
        %v1331 = vunpack.c.h.b16 %v601
        %v1332 = vunpack.c.l.b16 %v602
        %v1333 = vunpack.c.h.b16 %v602
        %v1334 = vunpack.c.l.b16 %v603
        %v1335 = vunpack.c.h.b16 %v603
        %v1336 = vunpack.c.l.b16 %v604
        %v1337 = vunpack.c.h.b16 %v604
        %v1338 = vunpack.c.l.b16 %v605
        %v1339 = vunpack.c.h.b16 %v605
        %v1340 = vunpack.c.l.b16 %v606
        %v1341 = vunpack.c.h.b16 %v606
        %v1342 = vunpack.c.l.b16 %v607
        %v1343 = vunpack.c.h.b16 %v607
        %v1344 = vunpack.c.l.b16 %v608
        %v1345 = vunpack.c.h.b16 %v608
        %v1346 = vunpack.c.l.b16 %v609
        %v1347 = vunpack.c.h.b16 %v609
        %v1348 = vunpack.c.l.b16 %v610
        %v1349 = vunpack.c.h.b16 %v610
        %v1350 = vunpack.c.l.b16 %v611
        %v1351 = vunpack.c.h.b16 %v611
        %v1352 = vunpack.c.l.b16 %v612
        %v1353 = vunpack.c.h.b16 %v612
        %v1354 = vunpack.c.l.b16 %v613
        %v1355 = vunpack.c.h.b16 %v613
        %v1356 = vunpack.c.l.b16 %v614
        %v1357 = vunpack.c.h.b16 %v614
        %v1358 = vunpack.c.l.b16 %v615
        %v1359 = vunpack.c.h.b16 %v615
        %v1360 = vunpack.c.l.b16 %v616
        %v1361 = vunpack.c.h.b16 %v616
        %v1362 = vunpack.c.l.b16 %v617
        %v1363 = vunpack.c.h.b16 %v617
        %v1364 = vunpack.c.l.b16 %v618
        %v1365 = vunpack.c.h.b16 %v618
        %v1366 = vunpack.c.l.b16 %v619
        %v1367 = vunpack.c.h.b16 %v619
        %v1368 = vunpack.c.l.b16 %v620
        %v1369 = vunpack.c.h.b16 %v620
        %v1370 = vunpack.c.l.b16 %v621
        %v1371 = vunpack.c.h.b16 %v621
        %v1372 = vunpack.c.l.b16 %v622
        %v1373 = vunpack.c.h.b16 %v622
        %v1374 = vunpack.c.l.b16 %v623
        %v1375 = vunpack.c.h.b16 %v623
        %v1376 = vunpack.c.l.b16 %v624
        %v1377 = vunpack.c.h.b16 %v624
        %v1378 = vunpack.c.l.b16 %v625
        %v1379 = vunpack.c.h.b16 %v625
        %v1380 = vunpack.c.l.b16 %v626
        %v1381 = vunpack.c.h.b16 %v626
        %v1382 = vunpack.c.l.b16 %v627
        %v1383 = vunpack.c.h.b16 %v627
        %v1384 = vunpack.c.l.b16 %v628
        %v1385 = vunpack.c.h.b16 %v628
        %v1386 = vunpack.c.l.b16 %v629
        %v1387 = vunpack.c.h.b16 %v629
        %v1388 = vunpack.c.l.b16 %v630
        %v1389 = vunpack.c.h.b16 %v630
        %v1390 = vunpack.c.l.b16 %v631
        %v1391 = vunpack.c.h.b16 %v631
        %v1392 = vunpack.c.l.b16 %v632
        %v1393 = vunpack.c.h.b16 %v632
        %v1394 = vunpack.c.l.b16 %v633
        %v1395 = vunpack.c.h.b16 %v633
        %v1396 = vunpack.c.l.b16 %v634
        %v1397 = vunpack.c.h.b16 %v634
        %v1398 = vunpack.c.l.b16 %v635
        %v1399 = vunpack.c.h.b16 %v635
        %v1400 = vunpack.c.l.b16 %v636
        %v1401 = vunpack.c.h.b16 %v636
        %v1402 = vunpack.c.l.b16 %v637
        %v1403 = vunpack.c.h.b16 %v637
        %v1404 = vunpack.c.l.b16 %v638
        %v1405 = vunpack.c.h.b16 %v638
        %v1406 = vunpack.c.l.b16 %v639
        %v1407 = vunpack.c.h.b16 %v639
        %v1408 = vunpack.c.l.b16 %v640
        %v1409 = vunpack.c.h.b16 %v640
        %v1410 = vunpack.c.l.b16 %v641
        %v1411 = vunpack.c.h.b16 %v641
        %v1412 = vunpack.c.l.b16 %v642
        %v1413 = vunpack.c.h.b16 %v642
        %v1414 = vunpack.c.l.b16 %v643
        %v1415 = vunpack.c.h.b16 %v643
        %v1416 = vunpack.c.l.b16 %v644
        %v1417 = vunpack.c.h.b16 %v644
        %v1418 = vunpack.c.l.b16 %v645
        %v1419 = vunpack.c.h.b16 %v645
        %v1420 = vunpack.c.l.b16 %v646
        %v1421 = vunpack.c.h.b16 %v646
        %v1422 = vunpack.c.l.b16 %v647
        %v1423 = vunpack.c.h.b16 %v647
        %v1424 = vunpack.c.l.b16 %v648
        %v1425 = vunpack.c.h.b16 %v648
        %v1426 = vunpack.c.l.b16 %v649
        %v1427 = vunpack.c.h.b16 %v649
        %v1428 = vunpack.c.l.b16 %v650
        %v1429 = vunpack.c.h.b16 %v650
        %v1430 = vunpack.c.l.b16 %v651
        %v1431 = vunpack.c.h.b16 %v651
        %v1432 = vunpack.c.l.b16 %v652
        %v1433 = vunpack.c.h.b16 %v652
        %v1434 = vunpack.c.l.b16 %v653
        %v1435 = vunpack.c.h.b16 %v653
        %v1436 = vunpack.c.l.b16 %v654
        %v1437 = vunpack.c.h.b16 %v654
        %v1438 = vunpack.c.l.b16 %v655
        %v1439 = vunpack.c.h.b16 %v655
        %v1440 = vunpack.c.l.b16 %v656
        %v1441 = vunpack.c.h.b16 %v656
        %v1442 = vunpack.c.l.b16 %v657
        %v1443 = vunpack.c.h.b16 %v657
        %v1444 = vunpack.c.l.b16 %v658
        %v1445 = vunpack.c.h.b16 %v658
        %v1446 = vunpack.c.l.b16 %v659
        %v1447 = vunpack.c.h.b16 %v659
        %v1448 = vunpack.c.l.b16 %v660
        %v1449 = vunpack.c.h.b16 %v660
        %v1450 = vunpack.c.l.b16 %v661
        %v1451 = vunpack.c.h.b16 %v661
        %v1452 = vunpack.c.l.b16 %v662
        %v1453 = vunpack.c.h.b16 %v662
        %v1454 = vunpack.c.l.b16 %v663
        %v1455 = vunpack.c.h.b16 %v663
        %v1456 = vunpack.c.l.b16 %v664
        %v1457 = vunpack.c.h.b16 %v664
        %v1458 = vunpack.c.l.b16 %v665
        %v1459 = vunpack.c.h.b16 %v665
        %v1460 = vunpack.c.l.b16 %v666
        %v1461 = vunpack.c.h.b16 %v666
        %v1462 = vunpack.c.l.b16 %v667
        %v1463 = vunpack.c.h.b16 %v667
        %v1464 = vunpack.c.l.b16 %v668
        %v1465 = vunpack.c.h.b16 %v668
        %v1466 = vunpack.c.l.b16 %v669
        %v1467 = vunpack.c.h.b16 %v669
        %v1468 = vunpack.c.l.b16 %v670
        %v1469 = vunpack.c.h.b16 %v670
        %v1470 = vunpack.c.l.b16 %v671
        %v1471 = vunpack.c.h.b16 %v671
        %v1472 = vunpack.c.l.b16 %v672
        %v1473 = vunpack.c.h.b16 %v672
        %v1474 = vunpack.c.l.b16 %v673
        %v1475 = vunpack.c.h.b16 %v673
        %v1476 = vunpack.c.l.b16 %v674
        %v1477 = vunpack.c.h.b16 %v674
        %v1478 = vunpack.c.l.b16 %v675
        %v1479 = vunpack.c.h.b16 %v675
        %v1480 = vunpack.c.l.b16 %v676
        %v1481 = vunpack.c.h.b16 %v676
        %v1482 = vunpack.c.l.b16 %v677
        %v1483 = vunpack.c.h.b16 %v677
        %v1484 = vunpack.c.l.b16 %v678
        %v1485 = vunpack.c.h.b16 %v678
        %v1486 = vunpack.c.l.b16 %v679
        %v1487 = vunpack.c.h.b16 %v679
        %v1488 = vunpack.c.l.b16 %v680
        %v1489 = vunpack.c.h.b16 %v680
        %v1490 = vunpack.c.l.b16 %v681
        %v1491 = vunpack.c.h.b16 %v681
        %v1492 = vunpack.c.l.b16 %v682
        %v1493 = vunpack.c.h.b16 %v682
        %v1494 = vunpack.c.l.b16 %v683
        %v1495 = vunpack.c.h.b16 %v683
        %v1496 = vunpack.c.l.b16 %v684
        %v1497 = vunpack.c.h.b16 %v684
        %v1498 = vunpack.c.l.b16 %v685
        %v1499 = vunpack.c.h.b16 %v685
        %v1500 = vunpack.c.l.b16 %v686
        %v1501 = vunpack.c.h.b16 %v686
        %v1502 = vunpack.c.l.b16 %v687
        %v1503 = vunpack.c.h.b16 %v687
        %v1504 = vunpack.c.l.b16 %v688
        %v1505 = vunpack.c.h.b16 %v688
        %v1506 = vunpack.c.l.b16 %v689
        %v1507 = vunpack.c.h.b16 %v689
        %v1508 = vunpack.c.l.b16 %v690
        %v1509 = vunpack.c.h.b16 %v690
        %v1510 = vunpack.c.l.b16 %v691
        %v1511 = vunpack.c.h.b16 %v691
        %v1512 = vunpack.c.l.b16 %v692
        %v1513 = vunpack.c.h.b16 %v692
        %v1514 = vunpack.c.l.b16 %v693
        %v1515 = vunpack.c.h.b16 %v693
        %v1516 = vunpack.c.l.b16 %v694
        %v1517 = vunpack.c.h.b16 %v694
        %v1518 = vunpack.c.l.b16 %v695
        %v1519 = vunpack.c.h.b16 %v695
        %v1520 = vunpack.c.l.b16 %v696
        %v1521 = vunpack.c.h.b16 %v696
        %v1522 = vunpack.c.l.b16 %v697
        %v1523 = vunpack.c.h.b16 %v697
        %v1524 = vpack.c.b16 %v1016, %v1012
        %v1525 = vpack.c.b16 %v1017, %v1013
        %v1526 = vpack.c.b16 %v1018, %v1014
        %v1527 = vpack.c.b16 %v1019, %v1015
        %v1528 = vpack.c.b16 %v1024, %v1020
        %v1529 = vpack.c.b16 %v1025, %v1021
        %v1530 = vpack.c.b16 %v1026, %v1022
        %v1531 = vpack.c.b16 %v1027, %v1023
        %v1532 = vpack.c.b16 %v1032, %v1028
        %v1533 = vpack.c.b16 %v1033, %v1029
        %v1534 = vpack.c.b16 %v1034, %v1030
        %v1535 = vpack.c.b16 %v1035, %v1031
        %v1536 = vpack.c.b16 %v1040, %v1036
        %v1537 = vpack.c.b16 %v1041, %v1037
        %v1538 = vpack.c.b16 %v1042, %v1038
        %v1539 = vpack.c.b16 %v1043, %v1039
        %v1540 = vpack.c.b16 %v1048, %v1044
        %v1541 = vpack.c.b16 %v1049, %v1045
        %v1542 = vpack.c.b16 %v1050, %v1046
        %v1543 = vpack.c.b16 %v1051, %v1047
        %v1544 = vpack.c.b16 %v1056, %v1052
        %v1545 = vpack.c.b16 %v1057, %v1053
        %v1546 = vpack.c.b16 %v1058, %v1054
        %v1547 = vpack.c.b16 %v1059, %v1055
        %v1548 = vpack.c.b16 %v1064, %v1060
        %v1549 = vpack.c.b16 %v1065, %v1061
        %v1550 = vpack.c.b16 %v1066, %v1062
        %v1551 = vpack.c.b16 %v1067, %v1063
        %v1552 = vpack.c.b16 %v1072, %v1068
        %v1553 = vpack.c.b16 %v1073, %v1069
        %v1554 = vpack.c.b16 %v1074, %v1070
        %v1555 = vpack.c.b16 %v1075, %v1071
        %v1556 = vpack.c.b16 %v1080, %v1076
        %v1557 = vpack.c.b16 %v1081, %v1077
        %v1558 = vpack.c.b16 %v1082, %v1078
        %v1559 = vpack.c.b16 %v1083, %v1079
        %v1560 = vpack.c.b16 %v1088, %v1084
        %v1561 = vpack.c.b16 %v1089, %v1085
        %v1562 = vpack.c.b16 %v1090, %v1086
        %v1563 = vpack.c.b16 %v1091, %v1087
        %v1564 = vpack.c.b16 %v1096, %v1092
        %v1565 = vpack.c.b16 %v1097, %v1093
        %v1566 = vpack.c.b16 %v1098, %v1094
        %v1567 = vpack.c.b16 %v1099, %v1095
        %v1568 = vpack.c.b16 %v1104, %v1100
        %v1569 = vpack.c.b16 %v1105, %v1101
        %v1570 = vpack.c.b16 %v1106, %v1102
        %v1571 = vpack.c.b16 %v1107, %v1103
        %v1572 = vpack.c.b16 %v1112, %v1108
        %v1573 = vpack.c.b16 %v1113, %v1109
        %v1574 = vpack.c.b16 %v1114, %v1110
        %v1575 = vpack.c.b16 %v1115, %v1111
        %v1576 = vpack.c.b16 %v1120, %v1116
        %v1577 = vpack.c.b16 %v1121, %v1117
        %v1578 = vpack.c.b16 %v1122, %v1118
        %v1579 = vpack.c.b16 %v1123, %v1119
        %v1580 = vpack.c.b16 %v1128, %v1124
        %v1581 = vpack.c.b16 %v1129, %v1125
        %v1582 = vpack.c.b16 %v1130, %v1126
        %v1583 = vpack.c.b16 %v1131, %v1127
        %v1584 = vpack.c.b16 %v1136, %v1132
        %v1585 = vpack.c.b16 %v1137, %v1133
        %v1586 = vpack.c.b16 %v1138, %v1134
        %v1587 = vpack.c.b16 %v1139, %v1135
        %v1588 = vpack.c.b16 %v1144, %v1140
        %v1589 = vpack.c.b16 %v1145, %v1141
        %v1590 = vpack.c.b16 %v1146, %v1142
        %v1591 = vpack.c.b16 %v1147, %v1143
        %v1592 = vpack.c.b16 %v1152, %v1148
        %v1593 = vpack.c.b16 %v1153, %v1149
        %v1594 = vpack.c.b16 %v1154, %v1150
        %v1595 = vpack.c.b16 %v1155, %v1151
        %v1596 = vpack.c.b16 %v1160, %v1156
        %v1597 = vpack.c.b16 %v1161, %v1157
        %v1598 = vpack.c.b16 %v1162, %v1158
        %v1599 = vpack.c.b16 %v1163, %v1159
        %v1600 = vpack.c.b16 %v1168, %v1164
        %v1601 = vpack.c.b16 %v1169, %v1165
        %v1602 = vpack.c.b16 %v1170, %v1166
        %v1603 = vpack.c.b16 %v1171, %v1167
        %v1604 = vpack.c.b16 %v1176, %v1172
        %v1605 = vpack.c.b16 %v1177, %v1173
        %v1606 = vpack.c.b16 %v1178, %v1174
        %v1607 = vpack.c.b16 %v1179, %v1175
        %v1608 = vpack.c.b16 %v1184, %v1180
        %v1609 = vpack.c.b16 %v1185, %v1181
        %v1610 = vpack.c.b16 %v1186, %v1182
        %v1611 = vpack.c.b16 %v1187, %v1183
        %v1612 = vpack.c.b16 %v1192, %v1188
        %v1613 = vpack.c.b16 %v1193, %v1189
        %v1614 = vpack.c.b16 %v1194, %v1190
        %v1615 = vpack.c.b16 %v1195, %v1191
        %v1616 = vpack.c.b16 %v1200, %v1196
        %v1617 = vpack.c.b16 %v1201, %v1197
        %v1618 = vpack.c.b16 %v1202, %v1198
        %v1619 = vpack.c.b16 %v1203, %v1199
        %v1620 = vpack.c.b16 %v1208, %v1204
        %v1621 = vpack.c.b16 %v1209, %v1205
        %v1622 = vpack.c.b16 %v1210, %v1206
        %v1623 = vpack.c.b16 %v1211, %v1207
        %v1624 = vpack.c.b16 %v1216, %v1212
        %v1625 = vpack.c.b16 %v1217, %v1213
        %v1626 = vpack.c.b16 %v1218, %v1214
        %v1627 = vpack.c.b16 %v1219, %v1215
        %v1628 = vpack.c.b16 %v1224, %v1220
        %v1629 = vpack.c.b16 %v1225, %v1221
        %v1630 = vpack.c.b16 %v1226, %v1222
        %v1631 = vpack.c.b16 %v1227, %v1223
        %v1632 = vpack.c.b16 %v1232, %v1228
        %v1633 = vpack.c.b16 %v1233, %v1229
        %v1634 = vpack.c.b16 %v1234, %v1230
        %v1635 = vpack.c.b16 %v1235, %v1231
        %v1636 = vpack.c.b16 %v1240, %v1236
        %v1637 = vpack.c.b16 %v1241, %v1237
        %v1638 = vpack.c.b16 %v1242, %v1238
        %v1639 = vpack.c.b16 %v1243, %v1239
        %v1640 = vpack.c.b16 %v1248, %v1244
        %v1641 = vpack.c.b16 %v1249, %v1245
        %v1642 = vpack.c.b16 %v1250, %v1246
        %v1643 = vpack.c.b16 %v1251, %v1247
        %v1644 = vpack.c.b16 %v1256, %v1252
        %v1645 = vpack.c.b16 %v1257, %v1253
        %v1646 = vpack.c.b16 %v1258, %v1254
        %v1647 = vpack.c.b16 %v1259, %v1255
        %v1648 = vpack.c.b16 %v1264, %v1260
        %v1649 = vpack.c.b16 %v1265, %v1261
        %v1650 = vpack.c.b16 %v1266, %v1262
        %v1651 = vpack.c.b16 %v1267, %v1263
        %v1652 = vpack.c.b16 %v1272, %v1268
        %v1653 = vpack.c.b16 %v1273, %v1269
        %v1654 = vpack.c.b16 %v1274, %v1270
        %v1655 = vpack.c.b16 %v1275, %v1271
        %v1656 = vpack.c.b16 %v1280, %v1276
        %v1657 = vpack.c.b16 %v1281, %v1277
        %v1658 = vpack.c.b16 %v1282, %v1278
        %v1659 = vpack.c.b16 %v1283, %v1279
        %v1660 = vpack.c.b16 %v1288, %v1284
        %v1661 = vpack.c.b16 %v1289, %v1285
        %v1662 = vpack.c.b16 %v1290, %v1286
        %v1663 = vpack.c.b16 %v1291, %v1287
        %v1664 = vpack.c.b16 %v1296, %v1292
        %v1665 = vpack.c.b16 %v1297, %v1293
        %v1666 = vpack.c.b16 %v1298, %v1294
        %v1667 = vpack.c.b16 %v1299, %v1295
        %v1668 = vpack.c.b16 %v1304, %v1300
        %v1669 = vpack.c.b16 %v1305, %v1301
        %v1670 = vpack.c.b16 %v1306, %v1302
        %v1671 = vpack.c.b16 %v1307, %v1303
        %v1672 = vpack.c.b16 %v1312, %v1308
        %v1673 = vpack.c.b16 %v1313, %v1309
        %v1674 = vpack.c.b16 %v1314, %v1310
        %v1675 = vpack.c.b16 %v1315, %v1311
        %v1676 = vpack.c.b16 %v1320, %v1316
        %v1677 = vpack.c.b16 %v1321, %v1317
        %v1678 = vpack.c.b16 %v1322, %v1318
        %v1679 = vpack.c.b16 %v1323, %v1319
        %v1680 = vpack.c.b16 %v1328, %v1324
        %v1681 = vpack.c.b16 %v1329, %v1325
        %v1682 = vpack.c.b16 %v1330, %v1326
        %v1683 = vpack.c.b16 %v1331, %v1327
        %v1684 = vpack.c.b16 %v1336, %v1332
        %v1685 = vpack.c.b16 %v1337, %v1333
        %v1686 = vpack.c.b16 %v1338, %v1334
        %v1687 = vpack.c.b16 %v1339, %v1335
        %v1688 = vpack.c.b16 %v1344, %v1340
        %v1689 = vpack.c.b16 %v1345, %v1341
        %v1690 = vpack.c.b16 %v1346, %v1342
        %v1691 = vpack.c.b16 %v1347, %v1343
        %v1692 = vpack.c.b16 %v1352, %v1348
        %v1693 = vpack.c.b16 %v1353, %v1349
        %v1694 = vpack.c.b16 %v1354, %v1350
        %v1695 = vpack.c.b16 %v1355, %v1351
        %v1696 = vpack.c.b16 %v1360, %v1356
        %v1697 = vpack.c.b16 %v1361, %v1357
        %v1698 = vpack.c.b16 %v1362, %v1358
        %v1699 = vpack.c.b16 %v1363, %v1359
        %v1700 = vpack.c.b16 %v1368, %v1364
        %v1701 = vpack.c.b16 %v1369, %v1365
        %v1702 = vpack.c.b16 %v1370, %v1366
        %v1703 = vpack.c.b16 %v1371, %v1367
        %v1704 = vpack.c.b16 %v1376, %v1372
        %v1705 = vpack.c.b16 %v1377, %v1373
        %v1706 = vpack.c.b16 %v1378, %v1374
        %v1707 = vpack.c.b16 %v1379, %v1375
        %v1708 = vpack.c.b16 %v1384, %v1380
        %v1709 = vpack.c.b16 %v1385, %v1381
        %v1710 = vpack.c.b16 %v1386, %v1382
        %v1711 = vpack.c.b16 %v1387, %v1383
        %v1712 = vpack.c.b16 %v1392, %v1388
        %v1713 = vpack.c.b16 %v1393, %v1389
        %v1714 = vpack.c.b16 %v1394, %v1390
        %v1715 = vpack.c.b16 %v1395, %v1391
        %v1716 = vpack.c.b16 %v1400, %v1396
        %v1717 = vpack.c.b16 %v1401, %v1397
        %v1718 = vpack.c.b16 %v1402, %v1398
        %v1719 = vpack.c.b16 %v1403, %v1399
        %v1720 = vpack.c.b16 %v1408, %v1404
        %v1721 = vpack.c.b16 %v1409, %v1405
        %v1722 = vpack.c.b16 %v1410, %v1406
        %v1723 = vpack.c.b16 %v1411, %v1407
        %v1724 = vpack.c.b16 %v1416, %v1412
        %v1725 = vpack.c.b16 %v1417, %v1413
        %v1726 = vpack.c.b16 %v1418, %v1414
        %v1727 = vpack.c.b16 %v1419, %v1415
        %v1728 = vpack.c.b16 %v1424, %v1420
        %v1729 = vpack.c.b16 %v1425, %v1421
        %v1730 = vpack.c.b16 %v1426, %v1422
        %v1731 = vpack.c.b16 %v1427, %v1423
        %v1732 = vpack.c.b16 %v1432, %v1428
        %v1733 = vpack.c.b16 %v1433, %v1429
        %v1734 = vpack.c.b16 %v1434, %v1430
        %v1735 = vpack.c.b16 %v1435, %v1431
        %v1736 = vpack.c.b16 %v1440, %v1436
        %v1737 = vpack.c.b16 %v1441, %v1437
        %v1738 = vpack.c.b16 %v1442, %v1438
        %v1739 = vpack.c.b16 %v1443, %v1439
        %v1740 = vpack.c.b16 %v1448, %v1444
        %v1741 = vpack.c.b16 %v1449, %v1445
        %v1742 = vpack.c.b16 %v1450, %v1446
        %v1743 = vpack.c.b16 %v1451, %v1447
        %v1744 = vpack.c.b16 %v1456, %v1452
        %v1745 = vpack.c.b16 %v1457, %v1453
        %v1746 = vpack.c.b16 %v1458, %v1454
        %v1747 = vpack.c.b16 %v1459, %v1455
        %v1748 = vpack.c.b16 %v1464, %v1460
        %v1749 = vpack.c.b16 %v1465, %v1461
        %v1750 = vpack.c.b16 %v1466, %v1462
        %v1751 = vpack.c.b16 %v1467, %v1463
        %v1752 = vpack.c.b16 %v1472, %v1468
        %v1753 = vpack.c.b16 %v1473, %v1469
        %v1754 = vpack.c.b16 %v1474, %v1470
        %v1755 = vpack.c.b16 %v1475, %v1471
        %v1756 = vpack.c.b16 %v1480, %v1476
        %v1757 = vpack.c.b16 %v1481, %v1477
        %v1758 = vpack.c.b16 %v1482, %v1478
        %v1759 = vpack.c.b16 %v1483, %v1479
        %v1760 = vpack.c.b16 %v1488, %v1484
        %v1761 = vpack.c.b16 %v1489, %v1485
        %v1762 = vpack.c.b16 %v1490, %v1486
        %v1763 = vpack.c.b16 %v1491, %v1487
        %v1764 = vpack.c.b16 %v1496, %v1492
        %v1765 = vpack.c.b16 %v1497, %v1493
        %v1766 = vpack.c.b16 %v1498, %v1494
        %v1767 = vpack.c.b16 %v1499, %v1495
        %v1768 = vpack.c.b16 %v1504, %v1500
        %v1769 = vpack.c.b16 %v1505, %v1501
        %v1770 = vpack.c.b16 %v1506, %v1502
        %v1771 = vpack.c.b16 %v1507, %v1503
        %v1772 = vpack.c.b16 %v1512, %v1508
        %v1773 = vpack.c.b16 %v1513, %v1509
        %v1774 = vpack.c.b16 %v1514, %v1510
        %v1775 = vpack.c.b16 %v1515, %v1511
        %v1776 = vpack.c.b16 %v1520, %v1516
        %v1777 = vpack.c.b16 %v1521, %v1517
        %v1778 = vpack.c.b16 %v1522, %v1518
        %v1779 = vpack.c.b16 %v1523, %v1519
        %2036 = vmatprep.subr.bf16.mxu0 %v1525
        %2037 = vmatpush1.bf16.msra.mxu0 %v1524
        %2038 = vmatprep.subr.bf16.mxu0 %v1529
        %2039 = vmatpush1.bf16.msra.mxu0 %v1528
        %2040 = vmatprep.subr.bf16.mxu0 %v1533
        %2041 = vmatpush1.bf16.msra.mxu0 %v1532
        %2042 = vmatprep.subr.bf16.mxu0 %v1537
        %2043 = vmatpush1.bf16.msra.mxu0 %v1536
        %2044 = vmatprep.subr.bf16.mxu0 %v1541
        %2045 = vmatpush1.bf16.msra.mxu0 %v1540
        %2046 = vmatprep.subr.bf16.mxu0 %v1545
        %2047 = vmatpush1.bf16.msra.mxu0 %v1544
        %2048 = vmatprep.subr.bf16.mxu0 %v1549
        %2049 = vmatpush1.bf16.msra.mxu0 %v1548
        %2050 = vmatprep.subr.bf16.mxu0 %v1553
        %2051 = vmatpush1.bf16.msra.mxu0 %v1552
        %2052 = vmatprep.subr.bf16.mxu0 %v1557
        %2053 = vmatpush1.bf16.msra.mxu0 %v1556
        %2054 = vmatprep.subr.bf16.mxu0 %v1561
        %2055 = vmatpush1.bf16.msra.mxu0 %v1560
        %2056 = vmatprep.subr.bf16.mxu0 %v1565
        %2057 = vmatpush1.bf16.msra.mxu0 %v1564
        %2058 = vmatprep.subr.bf16.mxu0 %v1569
        %2059 = vmatpush1.bf16.msra.mxu0 %v1568
        %2060 = vmatprep.subr.bf16.mxu0 %v1573
        %2061 = vmatpush1.bf16.msra.mxu0 %v1572
        %2062 = vmatprep.subr.bf16.mxu0 %v1577
        %2063 = vmatpush1.bf16.msra.mxu0 %v1576
        %2064 = vmatprep.subr.bf16.mxu0 %v1581
        %2065 = vmatpush1.bf16.msra.mxu0 %v1580
        %2066 = vmatprep.subr.bf16.mxu0 %v1585
        %2067 = vmatpush1.bf16.msra.mxu0 %v1584
        %2068 = vmatprep.mubr.bf16.mxu0 %v736
        %2069 = vmatmul.mubr.bf16.gmra.mrb[0].mxu0 %v722
        %v2070 = vpop.f32.mrb[0].mxu0
        %v2071 = vadd.f32 0.0, %v2070
        %v2072 = vpop.f32.mrb[0].mxu0
        %v2073 = vadd.f32 0.0, %v2072
        %v2074 = vpop.f32.mrb[0].mxu0
        %v2075 = vpop.f32.mrb[0].mxu0
        %2076 = vdwg.mxu0
        %2077 = vmatprep.subr.bf16.mxu0 %v1589
        %2078 = vmatpush1.bf16.msra.mxu0 %v1588
        %2079 = vmatprep.subr.bf16.mxu0 %v1593
        %2080 = vmatpush1.bf16.msra.mxu0 %v1592
        %2081 = vmatprep.subr.bf16.mxu0 %v1597
        %2082 = vmatpush1.bf16.msra.mxu0 %v1596
        %2083 = vmatprep.subr.bf16.mxu0 %v1601
        %2084 = vmatpush1.bf16.msra.mxu0 %v1600
        %2085 = vmatprep.subr.bf16.mxu0 %v1605
        %2086 = vmatpush1.bf16.msra.mxu0 %v1604
        %2087 = vmatprep.subr.bf16.mxu0 %v1609
        %2088 = vmatpush1.bf16.msra.mxu0 %v1608
        %2089 = vmatprep.subr.bf16.mxu0 %v1613
        %2090 = vmatpush1.bf16.msra.mxu0 %v1612
        %2091 = vmatprep.subr.bf16.mxu0 %v1617
        %2092 = vmatpush1.bf16.msra.mxu0 %v1616
        %2093 = vmatprep.subr.bf16.mxu0 %v1621
        %2094 = vmatpush1.bf16.msra.mxu0 %v1620
        %2095 = vmatprep.subr.bf16.mxu0 %v1625
        %2096 = vmatpush1.bf16.msra.mxu0 %v1624
        %2097 = vmatprep.subr.bf16.mxu0 %v1629
        %2098 = vmatpush1.bf16.msra.mxu0 %v1628
        %2099 = vmatprep.subr.bf16.mxu0 %v1633
        %2100 = vmatpush1.bf16.msra.mxu0 %v1632
        %2101 = vmatprep.subr.bf16.mxu0 %v1637
        %2102 = vmatpush1.bf16.msra.mxu0 %v1636
        %2103 = vmatprep.subr.bf16.mxu0 %v1641
        %2104 = vmatpush1.bf16.msra.mxu0 %v1640
        %2105 = vmatprep.subr.bf16.mxu0 %v1645
        %2106 = vmatpush1.bf16.msra.mxu0 %v1644
        %2107 = vmatprep.subr.bf16.mxu0 %v1649
        %2108 = vmatpush1.bf16.msra.mxu0 %v1648
        %2109 = vmatprep.mubr.bf16.mxu0 %v746
        %2110 = vmatmul.mubr.bf16.gmra.mrb[0].mxu0 %v744
        %v2111 = vpop.f32.mrb[0].mxu0
        %v2112 = vadd.f32 %v2071, %v2111
        %v2113 = vpop.f32.mrb[0].mxu0
        %v2114 = vadd.f32 %v2073, %v2113
        %v2115 = vpop.f32.mrb[0].mxu0
        %v2116 = vpop.f32.mrb[0].mxu0
        %2117 = vdwg.mxu0
        %2118 = vmatprep.subr.bf16.mxu0 %v1653
        %2119 = vmatpush1.bf16.msra.mxu0 %v1652
        %2120 = vmatprep.subr.bf16.mxu0 %v1657
        %2121 = vmatpush1.bf16.msra.mxu0 %v1656
        %2122 = vmatprep.subr.bf16.mxu0 %v1661
        %2123 = vmatpush1.bf16.msra.mxu0 %v1660
        %2124 = vmatprep.subr.bf16.mxu0 %v1665
        %2125 = vmatpush1.bf16.msra.mxu0 %v1664
        %2126 = vmatprep.subr.bf16.mxu0 %v1669
        %2127 = vmatpush1.bf16.msra.mxu0 %v1668
        %2128 = vmatprep.subr.bf16.mxu0 %v1673
        %2129 = vmatpush1.bf16.msra.mxu0 %v1672
        %2130 = vmatprep.subr.bf16.mxu0 %v1677
        %2131 = vmatpush1.bf16.msra.mxu0 %v1676
        %2132 = vmatprep.subr.bf16.mxu0 %v1681
        %2133 = vmatpush1.bf16.msra.mxu0 %v1680
        %2134 = vmatprep.subr.bf16.mxu0 %v1685
        %2135 = vmatpush1.bf16.msra.mxu0 %v1684
        %2136 = vmatprep.subr.bf16.mxu0 %v1689
        %2137 = vmatpush1.bf16.msra.mxu0 %v1688
        %2138 = vmatprep.subr.bf16.mxu0 %v1693
        %2139 = vmatpush1.bf16.msra.mxu0 %v1692
        %2140 = vmatprep.subr.bf16.mxu0 %v1697
        %2141 = vmatpush1.bf16.msra.mxu0 %v1696
        %2142 = vmatprep.subr.bf16.mxu0 %v1701
        %2143 = vmatpush1.bf16.msra.mxu0 %v1700
        %2144 = vmatprep.subr.bf16.mxu0 %v1705
        %2145 = vmatpush1.bf16.msra.mxu0 %v1704
        %2146 = vmatprep.subr.bf16.mxu0 %v1709
        %2147 = vmatpush1.bf16.msra.mxu0 %v1708
        %2148 = vmatprep.subr.bf16.mxu0 %v1713
        %2149 = vmatpush1.bf16.msra.mxu0 %v1712
        %2150 = vmatprep.mubr.bf16.mxu0 %v743
        %2151 = vmatmul.mubr.bf16.gmra.mrb[0].mxu0 %v729
        %v2152 = vpop.f32.mrb[0].mxu0
        %v2153 = vadd.f32 %v2112, %v2152
        %v2154 = vpop.f32.mrb[0].mxu0
        %v2155 = vadd.f32 %v2114, %v2154
        %v2156 = vpop.f32.mrb[0].mxu0
        %v2157 = vpop.f32.mrb[0].mxu0
        %2158 = vdwg.mxu0
        %2159 = vmatprep.subr.bf16.mxu0 %v1717
        %2160 = vmatpush1.bf16.msra.mxu0 %v1716
        %2161 = vmatprep.subr.bf16.mxu0 %v1721
        %2162 = vmatpush1.bf16.msra.mxu0 %v1720
        %2163 = vmatprep.subr.bf16.mxu0 %v1725
        %2164 = vmatpush1.bf16.msra.mxu0 %v1724
        %2165 = vmatprep.subr.bf16.mxu0 %v1729
        %2166 = vmatpush1.bf16.msra.mxu0 %v1728
        %2167 = vmatprep.subr.bf16.mxu0 %v1733
        %2168 = vmatpush1.bf16.msra.mxu0 %v1732
        %2169 = vmatprep.subr.bf16.mxu0 %v1737
        %2170 = vmatpush1.bf16.msra.mxu0 %v1736
        %2171 = vmatprep.subr.bf16.mxu0 %v1741
        %2172 = vmatpush1.bf16.msra.mxu0 %v1740
        %2173 = vmatprep.subr.bf16.mxu0 %v1745
        %2174 = vmatpush1.bf16.msra.mxu0 %v1744
        %2175 = vmatprep.subr.bf16.mxu0 %v1749
        %2176 = vmatpush1.bf16.msra.mxu0 %v1748
        %2177 = vmatprep.subr.bf16.mxu0 %v1753
        %2178 = vmatpush1.bf16.msra.mxu0 %v1752
        %2179 = vmatprep.subr.bf16.mxu0 %v1757
        %2180 = vmatpush1.bf16.msra.mxu0 %v1756
        %2181 = vmatprep.subr.bf16.mxu0 %v1761
        %2182 = vmatpush1.bf16.msra.mxu0 %v1760
        %2183 = vmatprep.subr.bf16.mxu0 %v1765
        %2184 = vmatpush1.bf16.msra.mxu0 %v1764
        %2185 = vmatprep.subr.bf16.mxu0 %v1769
        %2186 = vmatpush1.bf16.msra.mxu0 %v1768
        %2187 = vmatprep.subr.bf16.mxu0 %v1773
        %2188 = vmatpush1.bf16.msra.mxu0 %v1772
        %2189 = vmatprep.subr.bf16.mxu0 %v1777
        %2190 = vmatpush1.bf16.msra.mxu0 %v1776
        %2191 = vmatprep.mubr.bf16.mxu0 %v747
        %2192 = vmatmul.mubr.bf16.gmra.mrb[0].mxu0 %v745
        %v2193 = vpop.f32.mrb[0].mxu0
        %v2194 = vadd.f32 %v2153, %v2193
        %v2195 = vpop.f32.mrb[0].mxu0
        %v2196 = vadd.f32 %v2155, %v2195
        %v2197 = vpop.f32.mrb[0].mxu0
        %v2198 = vpop.f32.mrb[0].mxu0
        %2199 = vdwg.mxu0
        %2200 = vmatprep.subr.bf16.mxu0 %v1527
        %2201 = vmatpush1.bf16.msra.mxu0 %v1526
        %2202 = vmatprep.subr.bf16.mxu0 %v1531
        %2203 = vmatpush1.bf16.msra.mxu0 %v1530
        %2204 = vmatprep.subr.bf16.mxu0 %v1535
        %2205 = vmatpush1.bf16.msra.mxu0 %v1534
        %2206 = vmatprep.subr.bf16.mxu0 %v1539
        %2207 = vmatpush1.bf16.msra.mxu0 %v1538
        %2208 = vmatprep.subr.bf16.mxu0 %v1543
        %2209 = vmatpush1.bf16.msra.mxu0 %v1542
        %2210 = vmatprep.subr.bf16.mxu0 %v1547
        %2211 = vmatpush1.bf16.msra.mxu0 %v1546
        %2212 = vmatprep.subr.bf16.mxu0 %v1551
        %2213 = vmatpush1.bf16.msra.mxu0 %v1550
        %2214 = vmatprep.subr.bf16.mxu0 %v1555
        %2215 = vmatpush1.bf16.msra.mxu0 %v1554
        %2216 = vmatprep.subr.bf16.mxu0 %v1559
        %2217 = vmatpush1.bf16.msra.mxu0 %v1558
        %2218 = vmatprep.subr.bf16.mxu0 %v1563
        %2219 = vmatpush1.bf16.msra.mxu0 %v1562
        %2220 = vmatprep.subr.bf16.mxu0 %v1567
        %2221 = vmatpush1.bf16.msra.mxu0 %v1566
        %2222 = vmatprep.subr.bf16.mxu0 %v1571
        %2223 = vmatpush1.bf16.msra.mxu0 %v1570
        %2224 = vmatprep.subr.bf16.mxu0 %v1575
        %2225 = vmatpush1.bf16.msra.mxu0 %v1574
        %2226 = vmatprep.subr.bf16.mxu0 %v1579
        %2227 = vmatpush1.bf16.msra.mxu0 %v1578
        %2228 = vmatprep.subr.bf16.mxu0 %v1583
        %2229 = vmatpush1.bf16.msra.mxu0 %v1582
        %2230 = vmatprep.subr.bf16.mxu0 %v1587
        %2231 = vmatpush1.bf16.msra.mxu0 %v1586
        %2232 = vmatprep.mubr.bf16.mxu0 %v736
        %2233 = vmatmul.mubr.bf16.gmra.mrb[0].mxu0 %v722
        %v2234 = vpop.f32.mrb[0].mxu0
        %v2235 = vadd.f32 0.0, %v2234
        %v2236 = vpop.f32.mrb[0].mxu0
        %v2237 = vadd.f32 0.0, %v2236
        %v2238 = vpop.f32.mrb[0].mxu0
        %v2239 = vpop.f32.mrb[0].mxu0
        %2240 = vdwg.mxu0
        %2241 = vmatprep.subr.bf16.mxu0 %v1591
        %2242 = vmatpush1.bf16.msra.mxu0 %v1590
        %2243 = vmatprep.subr.bf16.mxu0 %v1595
        %2244 = vmatpush1.bf16.msra.mxu0 %v1594
        %2245 = vmatprep.subr.bf16.mxu0 %v1599
        %2246 = vmatpush1.bf16.msra.mxu0 %v1598
        %2247 = vmatprep.subr.bf16.mxu0 %v1603
        %2248 = vmatpush1.bf16.msra.mxu0 %v1602
        %2249 = vmatprep.subr.bf16.mxu0 %v1607
        %2250 = vmatpush1.bf16.msra.mxu0 %v1606
        %2251 = vmatprep.subr.bf16.mxu0 %v1611
        %2252 = vmatpush1.bf16.msra.mxu0 %v1610
        %2253 = vmatprep.subr.bf16.mxu0 %v1615
        %2254 = vmatpush1.bf16.msra.mxu0 %v1614
        %2255 = vmatprep.subr.bf16.mxu0 %v1619
        %2256 = vmatpush1.bf16.msra.mxu0 %v1618
        %2257 = vmatprep.subr.bf16.mxu0 %v1623
        %2258 = vmatpush1.bf16.msra.mxu0 %v1622
        %2259 = vmatprep.subr.bf16.mxu0 %v1627
        %2260 = vmatpush1.bf16.msra.mxu0 %v1626
        %2261 = vmatprep.subr.bf16.mxu0 %v1631
        %2262 = vmatpush1.bf16.msra.mxu0 %v1630
        %2263 = vmatprep.subr.bf16.mxu0 %v1635
        %2264 = vmatpush1.bf16.msra.mxu0 %v1634
        %2265 = vmatprep.subr.bf16.mxu0 %v1639
        %2266 = vmatpush1.bf16.msra.mxu0 %v1638
        %2267 = vmatprep.subr.bf16.mxu0 %v1643
        %2268 = vmatpush1.bf16.msra.mxu0 %v1642
        %2269 = vmatprep.subr.bf16.mxu0 %v1647
        %2270 = vmatpush1.bf16.msra.mxu0 %v1646
        %2271 = vmatprep.subr.bf16.mxu0 %v1651
        %2272 = vmatpush1.bf16.msra.mxu0 %v1650
        %2273 = vmatprep.mubr.bf16.mxu0 %v746
        %2274 = vmatmul.mubr.bf16.gmra.mrb[0].mxu0 %v744
        %v2275 = vpop.f32.mrb[0].mxu0
        %v2276 = vadd.f32 %v2235, %v2275
        %v2277 = vpop.f32.mrb[0].mxu0
        %v2278 = vadd.f32 %v2237, %v2277
        %v2279 = vpop.f32.mrb[0].mxu0
        %v2280 = vpop.f32.mrb[0].mxu0
        %2281 = vdwg.mxu0
        %2282 = vmatprep.subr.bf16.mxu0 %v1655
        %2283 = vmatpush1.bf16.msra.mxu0 %v1654
        %2284 = vmatprep.subr.bf16.mxu0 %v1659
        %2285 = vmatpush1.bf16.msra.mxu0 %v1658
        %2286 = vmatprep.subr.bf16.mxu0 %v1663
        %2287 = vmatpush1.bf16.msra.mxu0 %v1662
        %2288 = vmatprep.subr.bf16.mxu0 %v1667
        %2289 = vmatpush1.bf16.msra.mxu0 %v1666
        %2290 = vmatprep.subr.bf16.mxu0 %v1671
        %2291 = vmatpush1.bf16.msra.mxu0 %v1670
        %2292 = vmatprep.subr.bf16.mxu0 %v1675
        %2293 = vmatpush1.bf16.msra.mxu0 %v1674
        %2294 = vmatprep.subr.bf16.mxu0 %v1679
        %2295 = vmatpush1.bf16.msra.mxu0 %v1678
        %2296 = vmatprep.subr.bf16.mxu0 %v1683
        %2297 = vmatpush1.bf16.msra.mxu0 %v1682
        %2298 = vmatprep.subr.bf16.mxu0 %v1687
        %2299 = vmatpush1.bf16.msra.mxu0 %v1686
        %2300 = vmatprep.subr.bf16.mxu0 %v1691
        %2301 = vmatpush1.bf16.msra.mxu0 %v1690
        %2302 = vmatprep.subr.bf16.mxu0 %v1695
        %2303 = vmatpush1.bf16.msra.mxu0 %v1694
        %2304 = vmatprep.subr.bf16.mxu0 %v1699
        %2305 = vmatpush1.bf16.msra.mxu0 %v1698
        %2306 = vmatprep.subr.bf16.mxu0 %v1703
        %2307 = vmatpush1.bf16.msra.mxu0 %v1702
        %2308 = vmatprep.subr.bf16.mxu0 %v1707
        %2309 = vmatpush1.bf16.msra.mxu0 %v1706
        %2310 = vmatprep.subr.bf16.mxu0 %v1711
        %2311 = vmatpush1.bf16.msra.mxu0 %v1710
        %2312 = vmatprep.subr.bf16.mxu0 %v1715
        %2313 = vmatpush1.bf16.msra.mxu0 %v1714
        %2314 = vmatprep.mubr.bf16.mxu0 %v743
        %2315 = vmatmul.mubr.bf16.gmra.mrb[0].mxu0 %v729
        %v2316 = vpop.f32.mrb[0].mxu0
        %v2317 = vadd.f32 %v2276, %v2316
        %v2318 = vpop.f32.mrb[0].mxu0
        %v2319 = vadd.f32 %v2278, %v2318
        %v2320 = vpop.f32.mrb[0].mxu0
        %v2321 = vpop.f32.mrb[0].mxu0
        %2322 = vdwg.mxu0
        %2323 = vmatprep.subr.bf16.mxu0 %v1719
        %2324 = vmatpush1.bf16.msra.mxu0 %v1718
        %2325 = vmatprep.subr.bf16.mxu0 %v1723
        %2326 = vmatpush1.bf16.msra.mxu0 %v1722
        %2327 = vmatprep.subr.bf16.mxu0 %v1727
        %2328 = vmatpush1.bf16.msra.mxu0 %v1726
        %2329 = vmatprep.subr.bf16.mxu0 %v1731
        %2330 = vmatpush1.bf16.msra.mxu0 %v1730
        %2331 = vmatprep.subr.bf16.mxu0 %v1735
        %2332 = vmatpush1.bf16.msra.mxu0 %v1734
        %2333 = vmatprep.subr.bf16.mxu0 %v1739
        %2334 = vmatpush1.bf16.msra.mxu0 %v1738
        %2335 = vmatprep.subr.bf16.mxu0 %v1743
        %2336 = vmatpush1.bf16.msra.mxu0 %v1742
        %2337 = vmatprep.subr.bf16.mxu0 %v1747
        %2338 = vmatpush1.bf16.msra.mxu0 %v1746
        %2339 = vmatprep.subr.bf16.mxu0 %v1751
        %2340 = vmatpush1.bf16.msra.mxu0 %v1750
        %2341 = vmatprep.subr.bf16.mxu0 %v1755
        %2342 = vmatpush1.bf16.msra.mxu0 %v1754
        %2343 = vmatprep.subr.bf16.mxu0 %v1759
        %2344 = vmatpush1.bf16.msra.mxu0 %v1758
        %2345 = vmatprep.subr.bf16.mxu0 %v1763
        %2346 = vmatpush1.bf16.msra.mxu0 %v1762
        %2347 = vmatprep.subr.bf16.mxu0 %v1767
        %2348 = vmatpush1.bf16.msra.mxu0 %v1766
        %2349 = vmatprep.subr.bf16.mxu0 %v1771
        %2350 = vmatpush1.bf16.msra.mxu0 %v1770
        %2351 = vmatprep.subr.bf16.mxu0 %v1775
        %2352 = vmatpush1.bf16.msra.mxu0 %v1774
        %2353 = vmatprep.subr.bf16.mxu0 %v1779
        %2354 = vmatpush1.bf16.msra.mxu0 %v1778
        %2355 = vmatprep.mubr.bf16.mxu0 %v747
        %2356 = vmatmul.mubr.bf16.gmra.mrb[0].mxu0 %v745
        %v2357 = vpop.f32.mrb[0].mxu0
        %v2358 = vadd.f32 %v2317, %v2357
        %v2359 = vpop.f32.mrb[0].mxu0
        %v2360 = vadd.f32 %v2319, %v2359
        %v2361 = vpop.f32.mrb[0].mxu0
        %v2362 = vpop.f32.mrb[0].mxu0
        %2363 = vdwg.mxu0
        %v2368 = vcombine.low %v2194, %v2196
        %v2369 = vcombine.low %v2358, %v2360
        %v2371 = vunpack.c.l.s4 1983009808
        %v2372 = vunpack.c.0.s8 %v2371
        %v2373 = vlaneseq
        %v2374 = vshrl.u32 %v2373, 7
        %v2375 = vsub.s32 %v2372, %v2374
        %v2376 = vrot.slane %v2368, %v2375
        %v2378 = vunpack.c.l.s4 1983009808
        %v2379 = vunpack.c.0.s8 %v2378
        %v2380 = vlaneseq
        %v2381 = vshrl.u32 %v2380, 7
        %v2382 = vsub.s32 %v2379, %v2381
        %v2383 = vrot.slane %v2369, %v2382
        %v2384 = vcombine.low %v2376, %v2383
        %v2386 = vadd.f32 %v440, %v2384
        %2387 = vst [vmem:[#allocation2] sm:$0xff] %v2386
        // Predicated region
        $region65: #{tpu_custom_call.1} parent=39 // pred_check
          %p2388 = pneg %p435
        $region66: #{tpu_custom_call.1} parent=39 // pred_check_branch
          %2390 = sbr.rel (%p2388) target = $region68
        $region67: #{tpu_custom_call.1} parent=39 // pred_region
          %v2391 = vld [vmem:[#allocation2] sm:$0xff]
          %v2392 = vld [vmem:[%s360] sm:$0xf]
          %v2394 = vlaneseq
          %v2395 = vshrl.u32 %v2394, 7
          %v2396 = vsub.s32 0, %v2395
          %v2397 = vrot.slane %v2392, %v2396
          %v2398 = vlaneseq
          %v2399 = vshrl.u32 %v2398, 7
          %v2400 = vsub.s32 1, %v2399
          %v2401 = vrot.slane %v2392, %v2400
          %v2402 = vlaneseq
          %v2403 = vshrl.u32 %v2402, 7
          %v2404 = vsub.s32 2, %v2403
          %v2405 = vrot.slane %v2392, %v2404
          %v2406 = vlaneseq
          %v2407 = vshrl.u32 %v2406, 7
          %v2408 = vsub.s32 3, %v2407
          %v2409 = vrot.slane %v2392, %v2408
          %v2410 = vcombine.low %v2397, %v2401
          %v2411 = vcombine.low %v2405, %v2409
          %v2413 = vunpack.c.l.s4 1983009808
          %v2414 = vunpack.c.0.s8 %v2413
          %v2415 = vlaneseq
          %v2416 = vshrl.u32 %v2415, 7
          %v2417 = vsub.s32 %v2414, %v2416
          %v2418 = vrot.slane %v2410, %v2417
          %v2420 = vunpack.c.l.s4 1983009808
          %v2421 = vunpack.c.0.s8 %v2420
          %v2422 = vlaneseq
          %v2423 = vshrl.u32 %v2422, 7
          %v2424 = vsub.s32 %v2421, %v2423
          %v2425 = vrot.slane %v2411, %v2424
          %v2426 = vcombine.low %v2418, %v2425
          %v2428 = vadd.f32 %v2391, %v2426
          %vm2429 = vcmp.ge.f32.partialorder %v2428, 0.0
          %v2430 = vmul.f32 %v2428, 0.2
          %v2431 = vsel %vm2429, %v2428, %v2430
          %v2432 = vmul.f32 %v2431, 0.5
          %v2433 = vmul.f32 %v2432, 1.442695
          %v2434 = vpow.pop %v2433
          %v2435 = vld [vmem:[%s378] sm:$0xff]
          %v2436 = vmul.f32 %v2435, %v2434
          %v2437 = vld [vmem:[%s369] sm:$0xff]
          %v2438 = vadd.f32 %v2436, %v2437
          %2439 = vst [vmem:[%s419] sm:$0xff] %v2438
          %2440 = vst [vmem:[%s426] sm:$0xff] %v2431
        $region68: #{tpu_custom_call.1} parent=39 // pred_fallthru
          _
        %s2441 = sand.u32 %s183, 1
        %s2442 = scalar_lea.sflag [#allocation5], %s2441
        %s2443 = sand.u32 %s183, 1
        %s2444 = smul.addr %s2443, 8
        %s2445 = scalar_lea.vmem [#allocation12], %s2444
        %s2446 = sand.u32 %s209, 1
        %s2447 = scalar_lea.sflag [#allocation14], %s2446
        %s2448 = sand.u32 %s209, 1
        %s2449 = smul.addr %s2448, 8
        %s2450 = scalar_lea.vmem [#allocation13], %s2449
        // Predicated region
        $region69: #{tpu_custom_call.1} parent=39 // pred_check
          %p2451 = pneg %p193
        $region70: #{tpu_custom_call.1} parent=39 // pred_check_branch
          %2453 = sbr.rel (%p2451) target = $region72
        $region71: #{tpu_custom_call.1} parent=39 // pred_region
          %s2454 = smul.u32 4, %s35
          %s2456 = ssub.s32 128, 128
          %2457 = vsyncadd %s2442, %s2456
          %s2458 = smul.addr %s2454, 32
          %s2459 = scalar_lea.hbm %s5, %s2458
          %s2461 = sshll.u32 %s2445, 4
          %s2462 = int_to_ptr.vmem [resolvable:$true] %s2461
          %2464 = dma.vmem_to_hbm [thread:$0]  %s2462, 128, %s2459, %s2442
        $region72: #{tpu_custom_call.1} parent=39 // pred_fallthru
          _
        // Predicated region
        $region73: #{tpu_custom_call.1} parent=39 // pred_check
          %p2465 = pneg %p219
        $region74: #{tpu_custom_call.1} parent=39 // pred_check_branch
          %2467 = sbr.rel (%p2465) target = $region76
        $region75: #{tpu_custom_call.1} parent=39 // pred_region
          %s2468 = smul.u32 4, %s35
          %s2470 = ssub.s32 128, 128
          %2471 = vsyncadd %s2447, %s2470
          %s2472 = smul.addr %s2468, 32
          %s2473 = scalar_lea.hbm %s6, %s2472
          %s2475 = sshll.u32 %s2450, 4
          %s2476 = int_to_ptr.vmem [resolvable:$true] %s2475
          %2478 = dma.vmem_to_hbm [thread:$0]  %s2476, 128, %s2473, %s2447
        $region76: #{tpu_custom_call.1} parent=39 // pred_fallthru
          _
      $region40: #{tpu_custom_call.1} parent=5 // pred_fallthru
        _
      %p2479 = scmp.le.s32.totalorder 2, %s26
      // Predicated region
      $region77: #{tpu_custom_call.1} parent=5 // pred_check
        %p2480 = pneg %p2479
      $region78: #{tpu_custom_call.1} parent=5 // pred_check_branch
        %2482 = sbr.rel (%p2480) target = $region80
      $region79: #{tpu_custom_call.1} parent=5 // pred_region
        %s2483 = ssub.s32 %s26, 2
        // Predicated region
        $region81: #{tpu_custom_call.1} parent=79 // pred_check
          %p2484 = pneg %p199
        $region82: #{tpu_custom_call.1} parent=79 // pred_check_branch
          %2486 = sbr.rel (%p2484) target = $region84
        $region83: #{tpu_custom_call.1} parent=79 // pred_region
          %s2487 = sand.u32 %s184, 1
          %s2488 = scalar_lea.sflag [#allocation5], %s2487
          %s2489 = sand.u32 %s184, 1
          %s2490 = smul.addr %s2489, 8
          %s2491 = scalar_lea.vmem [#allocation12], %s2490
          %2492 = dma.done %s2488, 128
        $region84: #{tpu_custom_call.1} parent=79 // pred_fallthru
          _
        // Predicated region
        $region85: #{tpu_custom_call.1} parent=79 // pred_check
          %p2493 = pneg %p225
        $region86: #{tpu_custom_call.1} parent=79 // pred_check_branch
          %2495 = sbr.rel (%p2493) target = $region88
        $region87: #{tpu_custom_call.1} parent=79 // pred_region
          %s2496 = sand.u32 %s210, 1
          %s2497 = scalar_lea.sflag [#allocation14], %s2496
          %s2498 = sand.u32 %s210, 1
          %s2499 = smul.addr %s2498, 8
          %s2500 = scalar_lea.vmem [#allocation13], %s2499
          %2501 = dma.done %s2497, 128
        $region88: #{tpu_custom_call.1} parent=79 // pred_fallthru
          _
      $region80: #{tpu_custom_call.1} parent=5 // pred_fallthru
        _
    $region6: #{tpu_custom_call.1} parent=1 // loop_footer
      %s30 = sadd.s32 1, %s26
    $region7: #{tpu_custom_call.1} parent=1 // loop_footer_branch
      %25 = sbr.rel target = $region3
    $region8: #{tpu_custom_call.1} parent=1 // loop_exit
      _
    %2502 = vsyncpa [#allocation4], 1
    %s2503 = scalar_lea.sflag [#allocation4], 1
    %2504 = vsyncpa %s2503, 1
    %2505 = vsyncpa [#allocation7], 1
    %s2506 = scalar_lea.sflag [#allocation7], 1
    %2507 = vsyncpa %s2506, 1
    %2508 = vsyncpa [#allocation10], 1
    %s2509 = scalar_lea.sflag [#allocation10], 1
    %2510 = vsyncpa %s2509, 1
    %2511 = vsyncpa [#allocation5], 1
    %s2512 = scalar_lea.sflag [#allocation5], 1
    %2513 = vsyncpa %s2512, 1
    %2514 = vsyncpa [#allocation14], 1
    %s2515 = scalar_lea.sflag [#allocation14], 1
    %2516 = vsyncpa %s2515, 1

</llo_original>
